<compile_context>
chip_gen: v7x
topology: tpu7x:2x2x1
jax: 0.10.0
libtpu: 0.0.40
codegen_flags: <defaults>
</compile_context>

<pallas_src>
import functools

import jax
import jax.numpy as jnp
from jax.experimental import pallas as pl
from jax.experimental.pallas import tpu as pltpu

LANE = 128


def _pad_last(x, mult=LANE):
    pad = (-x.shape[-1]) % mult
    if pad:
        x = jnp.pad(x, [(0, 0)] * (x.ndim - 1) + [(0, pad)])
    return x


def _cores_per_chip():
    """Heuristic: dual-TensorCore parts want >=2 'parallel' grid steps."""
    try:
        kind = jax.devices()[0].device_kind.lower()
    except Exception:
        return 1
    return 2 if ("7" in kind or "v4" in kind) else 1


def _pick_batch_block(batch, per_sample_bytes, act_budget_bytes=12 * 2**20):
    """Largest divisor of `batch` whose activation tile fits the VMEM budget.

    On dual-core chips also caps at batch//2 so the "parallel" grid axis has
    at least two steps to shard across TensorCores.  On single-core chips the
    grid is a serial loop, so the biggest tile that fits wins.
    """
    cap = max(1, min(batch, act_budget_bytes // max(per_sample_bytes, 1)))
    if _cores_per_chip() > 1 and batch > 1:
        cap = min(cap, max(1, batch // 2))
    bb = 1
    for d in range(1, cap + 1):
        if batch % d == 0:
            bb = d
    return bb


def _textcnn_kernel(tok_ref, table_ref, wconv_ref, bconv_ref, mask_ref,
                    fcw_ref, fcb_ref, out_ref, *, seq_len, k_max, batch_block):
    """Whole-batch-tile TextCNN forward.

    tok_ref   : (batch_block*S_pad, 1) int32 token ids (batch-major flattened)
    table_ref : (V_pad, E) bf16 embedding table
    wconv_ref : (k_max*E, NFp) bf16  -- all conv filters, zero-padded to k_max taps
    bconv_ref : (1, NFp) f32 conv biases
    mask_ref  : (S_pad, NFp) f32 additive time-validity mask (0 / -1e30)
    fcw_ref   : (NFp, Cp) f32, fcb_ref : (1, Cp) f32
    out_ref   : (batch_block, Cp) f32 (lane-dense; wrapper slices to class_num)
    """
    S = seq_len                      # padded sequence length (multiple of 8)
    bs = batch_block * S
    V, E = table_ref.shape
    NFp = wconv_ref.shape[1]

    # ---- fused embedding lookup: one-hot (bf16) @ table (bf16) on the MXU ----
    # TODO(synk): the one-hot path is only sensible for toy vocabularies; for a
    # realistic V the table should stay in HBM (memory_space=pl.ANY) and rows
    # be DMA-gathered (scalar-prefetched token ids + make_async_copy).
    tok = tok_ref[...]                                             # (bs, 1) int32
    vocab_iota = jax.lax.broadcasted_iota(jnp.int32, (bs, V), 1)
    onehot = (vocab_iota == tok).astype(jnp.bfloat16)              # (bs, V)
    emb = jnp.dot(onehot, table_ref[...],
                  preferred_element_type=jnp.float32)              # (bs, E) f32, exact bf16 values
    emb = emb.astype(jnp.bfloat16)                                 # lossless; halves im2col bytes

    # ---- im2col in bf16: column block j = emb shifted up by j rows ----------
    # Rows whose conv window runs past a sample's end pick up garbage here and
    # are killed by the additive mask before the max-pool.
    # TODO(synk): the row shifts could go through pltpu.roll (XLU) instead of
    # slice+concat relayouts once packed-dtype sublane rotates are verified on
    # the target toolchain.
    if k_max > 1:
        emb_pad = jnp.concatenate(
            [emb, jnp.zeros((k_max - 1, E), jnp.bfloat16)], axis=0)  # (bs+k_max-1, E)
    else:
        emb_pad = emb
    x2col = jnp.concatenate(
        [emb_pad[j:j + bs, :] for j in range(k_max)], axis=1)       # (bs, k_max*E) bf16

    # ---- all filter sizes in ONE matmul (weights zero-padded per size) ------
    conv = jnp.dot(x2col, wconv_ref[...],
                   preferred_element_type=jnp.float32)              # (bs, NFp) f32

    # ---- additive time-validity mask + single blocked max-pool over time ----
    conv3 = conv.reshape(batch_block, S, NFp) + mask_ref[...]       # broadcast add
    pooled = jnp.max(conv3, axis=1)                                 # (batch_block, NFp)

    # Bias + ReLU after the pool (exact: both are monotone non-decreasing).
    h = jnp.maximum(pooled + bconv_ref[...], 0.0)
    # TODO(synk): nn.Dropout is identity in eval mode; training dropout not implemented.
    # TODO(synk): multichannel / static second-embedding path not implemented (chanel_num=1).
    logits = jnp.dot(h, fcw_ref[...], preferred_element_type=jnp.float32) + fcb_ref[...]
    out_ref[...] = logits.astype(out_ref.dtype)                     # lane-dense store


def textcnn_forward(tokens, params, filter_sizes, *, batch_block=None):
    """tokens: (B, S) int32 ids. Returns logits (B, class_num)."""
    B, S = tokens.shape
    E = params["embedding"].shape[1]
    F = params["conv0_w"].shape[2]
    n = len(filter_sizes)
    k_max = max(filter_sizes)
    C = params["fc_b"].shape[-1]
    assert S >= k_max, "sequence must be at least as long as the largest filter"

    # Pad sequence length to a sublane multiple so the in-kernel
    # (bs, NFp) -> (batch_block, S_pad, NFp) reshape stays tile-aligned.
    S_pad = ((S + 7) // 8) * 8
    if S_pad != S:
        tokens = jnp.pad(tokens, ((0, 0), (0, S_pad - S)))          # padded rows masked below

    # ---- pack all conv filters into one (k_max*E, n*F->128) slab ------------
    nF = n * F
    cols = []
    for i, k in enumerate(filter_sizes):
        w = params[f"conv{i}_w"].reshape(k * E, F)                  # taps stacked along rows
        cols.append(jnp.pad(w, ((0, (k_max - k) * E), (0, 0))))     # zero-pad to k_max taps
    w_all = _pad_last(jnp.concatenate(cols, axis=1)).astype(jnp.bfloat16)   # (k_max*E, NFp)
    NFp = w_all.shape[1]

    b_all = _pad_last(jnp.concatenate(
        [params[f"conv{i}_b"].reshape(1, F) for i in range(n)], axis=1)
    ).astype(jnp.float32)                                           # (1, NFp)

    # Additive time-validity mask: 0 where the conv window fits in the ORIGINAL
    # sequence, -1e30 elsewhere (covers seq padding + im2col cross-sample rows).
    t = jnp.arange(S_pad)[:, None]
    mask_cols = [jnp.broadcast_to(jnp.where(t < (S - k + 1), 0.0, -1e30), (S_pad, F))
                 for k in filter_sizes]
    mask = _pad_last(jnp.concatenate(mask_cols, axis=1)).astype(jnp.float32)  # (S_pad, NFp)

    Cp = ((C + LANE - 1) // LANE) * LANE
    fc_w = jnp.pad(params["fc_w"], ((0, NFp - nF), (0, Cp - C))).astype(jnp.float32)
    fc_b = jnp.pad(params["fc_b"].reshape(1, C), ((0, 0), (0, Cp - C))).astype(jnp.float32)

    # Embedding table (bf16, rows padded to a multiple of 8 sublanes).
    V = params["embedding"].shape[0]
    V_pad = ((V + 7) // 8) * 8
    table = jnp.pad(params["embedding"], ((0, V_pad - V), (0, 0))).astype(jnp.bfloat16)

    tok2d = tokens.reshape(B * S_pad, 1).astype(jnp.int32)

    # ---- generation-aware tile sizing + explicit VMEM limit ------------------
    # Per-sample bytes of the big in-kernel intermediates (one-hot, emb, im2col,
    # conv, masked conv).
    per_sample = S_pad * (2 * V_pad + 6 * E + 2 * k_max * E + 8 * NFp)
    if batch_block is None:
        batch_block = _pick_batch_block(B, per_sample)
    assert B % batch_block == 0
    nb = B // batch_block
    bs = batch_block * S_pad

    fixed_bytes = 2 * (table.size * 2 + w_all.size * 2
                       + (b_all.size + mask.size + fc_w.size + fc_b.size) * 4
                       + bs * 4 + batch_block * Cp * 4)             # double-buffered operands
    vmem_limit = int(min(max(1.5 * (fixed_bytes + batch_block * per_sample),
                             32 * 2**20), 64 * 2**20))

    kernel = functools.partial(_textcnn_kernel, seq_len=S_pad, k_max=k_max,
                               batch_block=batch_block)
    out = pl.pallas_call(
        kernel,
        out_shape=jax.ShapeDtypeStruct((B, Cp), jnp.float32),
        grid=(nb,),
        in_specs=[
            pl.BlockSpec((bs, 1), lambda b: (b, 0)),                # tokens (batch tile)
            # Grid-invariant operands (constant index_map).
            # TODO(synk): tag these pipeline_mode=pl.Buffered(1) once
            # single-buffered operands are verified on the target toolchain;
            # double-buffering them only costs VMEM.
            pl.BlockSpec(table.shape, lambda b: (0, 0)),            # embedding table
            pl.BlockSpec(w_all.shape, lambda b: (0, 0)),            # fused conv weights
            pl.BlockSpec(b_all.shape, lambda b: (0, 0)),            # fused conv biases
            pl.BlockSpec(mask.shape, lambda b: (0, 0)),             # additive time mask
            pl.BlockSpec(fc_w.shape, lambda b: (0, 0)),
            pl.BlockSpec(fc_b.shape, lambda b: (0, 0)),
        ],
        out_specs=pl.BlockSpec((batch_block, Cp), lambda b: (b, 0)),
        compiler_params=pltpu.CompilerParams(
            dimension_semantics=("parallel",),
            vmem_limit_bytes=vmem_limit),
    )(tok2d, table, w_all, b_all, mask, fc_w, fc_b)
    return out[:, :C]


def textcnn_reference(tokens, params, filter_sizes):
    """Pure-JAX reference matching the PyTorch forward (eval mode).

    Uses the same bf16 rounding of embeddings/conv weights as the kernel so the
    comparison isolates structural correctness.
    """
    table = params["embedding"].astype(jnp.bfloat16).astype(jnp.float32)
    x = jnp.take(table, tokens, axis=0)                             # (B, S, E)
    feats = []
    for i, k in enumerate(filter_sizes):
        w = params[f"conv{i}_w"].astype(jnp.bfloat16).astype(jnp.float32)
        b = params[f"conv{i}_b"].reshape(-1)
        L = x.shape[1] - k + 1
        acc = sum(jnp.einsum("ble,ef->blf", x[:, j:j + L, :], w[j]) for j in range(k))
        feats.append(jnp.maximum(jnp.max(acc, axis=1) + b, 0.0))    # pool, +bias, ReLU
    feat = jnp.concatenate(feats, axis=1)
    return feat @ params["fc_w"] + params["fc_b"].reshape(-1)


def init_params(key, *, vocab, embed_dim, filter_num, filter_sizes, class_num):
    keys = jax.random.split(key, 3 + 2 * len(filter_sizes))
    params = {
        "embedding": 0.1 * jax.random.normal(keys[0], (vocab, embed_dim), jnp.float32),
        "fc_w": 0.1 * jax.random.normal(
            keys[1], (len(filter_sizes) * filter_num, class_num), jnp.float32),
        "fc_b": 0.1 * jax.random.normal(keys[2], (1, class_num), jnp.float32),
    }
    for i, k in enumerate(filter_sizes):
        params[f"conv{i}_w"] = 0.1 * jax.random.normal(
            keys[3 + 2 * i], (k, embed_dim, filter_num), jnp.float32)
        params[f"conv{i}_b"] = 0.1 * jax.random.normal(
            keys[4 + 2 * i], (1, filter_num), jnp.float32)
    return params


if __name__ == "__main__":
    # Config consistent with the module's args:
    #   vocabulary_size=50, embedding_dim=32, filter_num=8,
    #   filter_sizes=(3,4,5), class_num=4, batch=16, seq_len=16.
    VOCAB, EMBED, FNUM, FSIZES, CLASSES = 50, 32, 8, (3, 4, 5), 4
    BATCH, SEQ = 16, 16

    key = jax.random.PRNGKey(0)
    k_tok, k_par = jax.random.split(key)
    tokens = jax.random.randint(k_tok, (BATCH, SEQ), 0, VOCAB, dtype=jnp.int32)
    params = init_params(
        k_par, vocab=VOCAB, embed_dim=EMBED, filter_num=FNUM,
        filter_sizes=FSIZES, class_num=CLASSES)

    ref = textcnn_reference(tokens, params, FSIZES)

    # Auto-sized batch tile (largest-fit on single-core chips, >=2 parallel
    # steps on dual-core chips).
    logits = jax.block_until_ready(textcnn_forward(tokens, params, FSIZES))
    assert logits.shape == (BATCH, CLASSES)
    assert jnp.allclose(logits, ref, rtol=2e-3, atol=2e-3), (logits, ref)

    # Explicit 2-step "parallel" grid (the v7x-friendly tiling), same result.
    logits2 = jax.block_until_ready(
        textcnn_forward(tokens, params, FSIZES, batch_block=BATCH // 2))
    assert jnp.allclose(logits2, ref, rtol=2e-3, atol=2e-3), (logits2, ref)

    print("KERNEL_OK")
</pallas_src>

<mosaic_0001>
module attributes {stable_mosaic.version = 11 : i64} {
  func.func @_textcnn_kernel(%arg0: i32, %arg1: memref<256x1xi32, #tpu.memory_space<vmem>>, %arg2: memref<56x32xbf16, #tpu.memory_space<vmem>>, %arg3: memref<160x128xbf16, #tpu.memory_space<vmem>>, %arg4: memref<1x128xf32, #tpu.memory_space<vmem>>, %arg5: memref<16x128xf32, #tpu.memory_space<vmem>>, %arg6: memref<128x128xf32, #tpu.memory_space<vmem>>, %arg7: memref<1x128xf32, #tpu.memory_space<vmem>>, %arg8: memref<16x128xf32, #tpu.memory_space<vmem>>) attributes {dimension_semantics = [#tpu.dimension_semantics<parallel>], iteration_bounds = array<i64: 1>, scalar_prefetch = 0 : i64, scratch_operands = 0 : i64, tpu.core_type = #tpu.core_type<tc>, window_params = [{transform_indices = @transform_0, window_bounds = array<i64: 256, 1>}, {pipeline_mode = #tpu.pipeline_mode<synchronous>, transform_indices = @transform_1, window_bounds = array<i64: 56, 32>}, {pipeline_mode = #tpu.pipeline_mode<synchronous>, transform_indices = @transform_2, window_bounds = array<i64: 160, 128>}, {pipeline_mode = #tpu.pipeline_mode<synchronous>, transform_indices = @transform_3, window_bounds = array<i64: 1, 128>}, {pipeline_mode = #tpu.pipeline_mode<synchronous>, transform_indices = @transform_4, window_bounds = array<i64: 16, 128>}, {pipeline_mode = #tpu.pipeline_mode<synchronous>, transform_indices = @transform_5, window_bounds = array<i64: 128, 128>}, {pipeline_mode = #tpu.pipeline_mode<synchronous>, transform_indices = @transform_6, window_bounds = array<i64: 1, 128>}, {transform_indices = @transform_7, window_bounds = array<i64: 16, 128>}]} {
    %c0 = arith.constant 0 : index
    %c0_0 = arith.constant 0 : index
    %0 = vector.load %arg1[%c0, %c0_0] : memref<256x1xi32, #tpu.memory_space<vmem>>, vector<256x1xi32>
    %1 = tpu.iota {dimensions = array<i32: 1>} : vector<256x56xi32>
    %2 = vector.broadcast %0 : vector<256x1xi32> to vector<256x56xi32>
    %3 = arith.cmpi eq, %1, %2 : vector<256x56xi32>
    %4 = arith.extui %3 : vector<256x56xi1> to vector<256x56xi32>
    %5 = arith.sitofp %4 : vector<256x56xi32> to vector<256x56xf32>
    %6 = arith.truncf %5 : vector<256x56xf32> to vector<256x56xbf16>
    %c0_1 = arith.constant 0 : index
    %c0_2 = arith.constant 0 : index
    %7 = vector.load %arg2[%c0_1, %c0_2] : memref<56x32xbf16, #tpu.memory_space<vmem>>, vector<56x32xbf16>
    %cst = arith.constant dense<0.000000e+00> : vector<256x32xf32>
    %8 = tpu.matmul %6, %7, %cst {dimension_numbers = #tpu.dot_dimension_numbers<[1], [0], [0], [1], [0, 0, 1, 1], [], []>} : vector<256x56xbf16>, vector<56x32xbf16>, vector<256x32xf32> -> vector<256x32xf32>
    %9 = arith.truncf %8 : vector<256x32xf32> to vector<256x32xbf16>
    %cst_3 = arith.constant 0.000000e+00 : bf16
    %10 = vector.broadcast %cst_3 : bf16 to vector<4x32xbf16>
    %11 = tpu.concatenate %9, %10 in 0 : vector<256x32xbf16>, vector<4x32xbf16> -> vector<260x32xbf16>
    %12 = vector.extract_strided_slice %11 {offsets = [0, 0], sizes = [256, 32], strides = [1, 1]} : vector<260x32xbf16> to vector<256x32xbf16>
    %13 = vector.extract_strided_slice %11 {offsets = [1, 0], sizes = [256, 32], strides = [1, 1]} : vector<260x32xbf16> to vector<256x32xbf16>
    %14 = vector.extract_strided_slice %11 {offsets = [2, 0], sizes = [256, 32], strides = [1, 1]} : vector<260x32xbf16> to vector<256x32xbf16>
    %15 = vector.extract_strided_slice %11 {offsets = [3, 0], sizes = [256, 32], strides = [1, 1]} : vector<260x32xbf16> to vector<256x32xbf16>
    %16 = vector.extract_strided_slice %11 {offsets = [4, 0], sizes = [256, 32], strides = [1, 1]} : vector<260x32xbf16> to vector<256x32xbf16>
    %17 = tpu.concatenate %12, %13, %14, %15, %16 in 1 : vector<256x32xbf16>, vector<256x32xbf16>, vector<256x32xbf16>, vector<256x32xbf16>, vector<256x32xbf16> -> vector<256x160xbf16>
    %c0_4 = arith.constant 0 : index
    %c0_5 = arith.constant 0 : index
    %18 = vector.load %arg3[%c0_4, %c0_5] : memref<160x128xbf16, #tpu.memory_space<vmem>>, vector<160x128xbf16>
    %cst_6 = arith.constant dense<0.000000e+00> : vector<256x128xf32>
    %19 = tpu.matmul %17, %18, %cst_6 {dimension_numbers = #tpu.dot_dimension_numbers<[1], [0], [0], [1], [0, 0, 1, 1], [], []>} : vector<256x160xbf16>, vector<160x128xbf16>, vector<256x128xf32> -> vector<256x128xf32>
    %20 = vector.shape_cast %19 : vector<256x128xf32> to vector<16x16x128xf32>
    %c0_7 = arith.constant 0 : index
    %c0_8 = arith.constant 0 : index
    %21 = vector.load %arg5[%c0_7, %c0_8] : memref<16x128xf32, #tpu.memory_space<vmem>>, vector<16x128xf32>
    %22 = vector.shape_cast %21 : vector<16x128xf32> to vector<1x16x128xf32>
    %23 = vector.broadcast %22 : vector<1x16x128xf32> to vector<16x16x128xf32>
    %24 = arith.addf %20, %23 : vector<16x16x128xf32>
    %cst_9 = arith.constant dense<0xFF800000> : vector<16x128xf32>
    %25 = vector.multi_reduction <maximumf>, %24, %cst_9 [1] : vector<16x16x128xf32> to vector<16x128xf32>
    %c0_10 = arith.constant 0 : index
    %c0_11 = arith.constant 0 : index
    %26 = vector.load %arg4[%c0_10, %c0_11] : memref<1x128xf32, #tpu.memory_space<vmem>>, vector<1x128xf32>
    %27 = vector.broadcast %26 : vector<1x128xf32> to vector<16x128xf32>
    %28 = arith.addf %25, %27 : vector<16x128xf32>
    %cst_12 = arith.constant 0.000000e+00 : f32
    %29 = vector.broadcast %cst_12 : f32 to vector<16x128xf32>
    %30 = arith.maximumf %28, %29 : vector<16x128xf32>
    %c0_13 = arith.constant 0 : index
    %c0_14 = arith.constant 0 : index
    %31 = vector.load %arg6[%c0_13, %c0_14] : memref<128x128xf32, #tpu.memory_space<vmem>>, vector<128x128xf32>
    %cst_15 = arith.constant dense<0.000000e+00> : vector<16x128xf32>
    %32 = tpu.matmul %30, %31, %cst_15 {dimension_numbers = #tpu.dot_dimension_numbers<[1], [0], [0], [1], [0, 0, 1, 1], [], []>} : vector<16x128xf32>, vector<128x128xf32>, vector<16x128xf32> -> vector<16x128xf32>
    %c0_16 = arith.constant 0 : index
    %c0_17 = arith.constant 0 : index
    %33 = vector.load %arg7[%c0_16, %c0_17] : memref<1x128xf32, #tpu.memory_space<vmem>>, vector<1x128xf32>
    %34 = vector.broadcast %33 : vector<1x128xf32> to vector<16x128xf32>
    %35 = arith.addf %32, %34 : vector<16x128xf32>
    %c0_18 = arith.constant 0 : index
    %c0_19 = arith.constant 0 : index
    %36 = vector.load %arg8[%c0_18, %c0_19] : memref<16x128xf32, #tpu.memory_space<vmem>>, vector<16x128xf32>
    tpu.vector_store %arg8[%c0_18, %c0_19], %35 {strides = array<i32>} : memref<16x128xf32, #tpu.memory_space<vmem>>, vector<16x128xf32>,
    return
  }
  func.func @transform_0(%arg0: i32) -> (i32, i32) {
    %c0_i32 = arith.constant 0 : i32
    %c0_i32_0 = arith.constant 0 : i32
    return %arg0, %c0_i32 : i32, i32
  }
  func.func @transform_1(%arg0: i32) -> (i32, i32) {
    %c0_i32 = arith.constant 0 : i32
    %c0_i32_0 = arith.constant 0 : i32
    %c0_i32_1 = arith.constant 0 : i32
    return %c0_i32, %c0_i32_0 : i32, i32
  }
  func.func @transform_2(%arg0: i32) -> (i32, i32) {
    %c0_i32 = arith.constant 0 : i32
    %c0_i32_0 = arith.constant 0 : i32
    %c0_i32_1 = arith.constant 0 : i32
    return %c0_i32, %c0_i32_0 : i32, i32
  }
  func.func @transform_3(%arg0: i32) -> (i32, i32) {
    %c0_i32 = arith.constant 0 : i32
    %c0_i32_0 = arith.constant 0 : i32
    %c0_i32_1 = arith.constant 0 : i32
    return %c0_i32, %c0_i32_0 : i32, i32
  }
  func.func @transform_4(%arg0: i32) -> (i32, i32) {
    %c0_i32 = arith.constant 0 : i32
    %c0_i32_0 = arith.constant 0 : i32
    %c0_i32_1 = arith.constant 0 : i32
    return %c0_i32, %c0_i32_0 : i32, i32
  }
  func.func @transform_5(%arg0: i32) -> (i32, i32) {
    %c0_i32 = arith.constant 0 : i32
    %c0_i32_0 = arith.constant 0 : i32
    %c0_i32_1 = arith.constant 0 : i32
    return %c0_i32, %c0_i32_0 : i32, i32
  }
  func.func @transform_6(%arg0: i32) -> (i32, i32) {
    %c0_i32 = arith.constant 0 : i32
    %c0_i32_0 = arith.constant 0 : i32
    %c0_i32_1 = arith.constant 0 : i32
    return %c0_i32, %c0_i32_0 : i32, i32
  }
  func.func @transform_7(%arg0: i32) -> (i32, i32) {
    %c0_i32 = arith.constant 0 : i32
    %c0_i32_0 = arith.constant 0 : i32
    return %arg0, %c0_i32 : i32, i32
  }
}

</mosaic_0001>

<llo_original>
// kernel: tpu_custom_call.1
$region0: #{tpu_custom_call.1}
  #allocation0 [shape = 'u32[]', space=smem, size = 0x4, offset = 0x4, fixed_abs, tag = 'smem constant byte address 0x4 - core index']
  #allocation1 [shape = 'u32[144,128]{1,0:T(1,128)}', space=vmem, size = 0x12000, scoped, tag = 'internal scratch']
  %s0 = inlined_call_operand.vmem [shape: s32[256,1], index: 0, kind: input, shape index: {}]
  %s1 = inlined_call_operand.vmem [shape: bf16[56,32], index: 1, kind: input, shape index: {}]
  %s2 = inlined_call_operand.vmem [shape: bf16[160,128], index: 2, kind: input, shape index: {}]
  %s3 = inlined_call_operand.vmem [shape: f32[1,128], index: 3, kind: input, shape index: {}]
  %s4 = inlined_call_operand.vmem [shape: f32[16,128], index: 4, kind: input, shape index: {}]
  %s5 = inlined_call_operand.vmem [shape: f32[128,128], index: 5, kind: input, shape index: {}]
  %s6 = inlined_call_operand.vmem [shape: f32[1,128], index: 6, kind: input, shape index: {}]
  %s7 = inlined_call_operand.hbm [shape: f32[16,128], index: 7, kind: output, shape index: {}]
  %s8 = sld [smem:[#allocation0]]
  $region38: #{tpu_custom_call.1} parent=0
    _
  %s10 = ssub.s32 1, %s8
  %s11 = scalar_select 0, %s10, %s8
  $region1: #{tpu_custom_call.1} parent=0
    #allocation2 [shape = 'u8[8192]{0}', space=vmem, size = 0x2000, scoped, tag = 'output window, operand 0, single buffered']
    #allocation3 [shape = 's32[1]{0}', space=sflag, size = 0x4, scoped, tag = 'scoped memory for tpu_custom_call.1']
    %12 = vsyncpa [#allocation3], 0
    // Predicated region
    $region2: #{tpu_custom_call.1} parent=1 // pred_check
      _
    $region3: #{tpu_custom_call.1} parent=1 // pred_check_branch
      %14 = sbr.rel (0) target = $region5
    $region4: #{tpu_custom_call.1} parent=1 // pred_region
      _
    $region5: #{tpu_custom_call.1} parent=1 // pred_fallthru
      _
    // Predicated region
    $region6: #{tpu_custom_call.1} parent=1 // pred_check
      _
    $region7: #{tpu_custom_call.1} parent=1 // pred_check_branch
      %16 = sbr.rel (0) target = $region9
    $region8: #{tpu_custom_call.1} parent=1 // pred_region
      _
    $region9: #{tpu_custom_call.1} parent=1 // pred_fallthru
      _
    // Predicated region
    $region10: #{tpu_custom_call.1} parent=1 // pred_check
      _
    $region11: #{tpu_custom_call.1} parent=1 // pred_check_branch
      %18 = sbr.rel (0) target = $region13
    $region12: #{tpu_custom_call.1} parent=1 // pred_region
      _
    $region13: #{tpu_custom_call.1} parent=1 // pred_fallthru
      _
    // Predicated region
    $region14: #{tpu_custom_call.1} parent=1 // pred_check
      _
    $region15: #{tpu_custom_call.1} parent=1 // pred_check_branch
      %20 = sbr.rel (0) target = $region17
    $region16: #{tpu_custom_call.1} parent=1 // pred_region
      _
    $region17: #{tpu_custom_call.1} parent=1 // pred_fallthru
      _
    // Predicated region
    $region18: #{tpu_custom_call.1} parent=1 // pred_check
      _
    $region19: #{tpu_custom_call.1} parent=1 // pred_check_branch
      %22 = sbr.rel (0) target = $region21
    $region20: #{tpu_custom_call.1} parent=1 // pred_region
      _
    $region21: #{tpu_custom_call.1} parent=1 // pred_fallthru
      _
    // Predicated region
    $region22: #{tpu_custom_call.1} parent=1 // pred_check
      _
    $region23: #{tpu_custom_call.1} parent=1 // pred_check_branch
      %24 = sbr.rel (0) target = $region25
    $region24: #{tpu_custom_call.1} parent=1 // pred_region
      _
    $region25: #{tpu_custom_call.1} parent=1 // pred_fallthru
      _
    // Predicated region
    $region26: #{tpu_custom_call.1} parent=1 // pred_check
      _
    $region27: #{tpu_custom_call.1} parent=1 // pred_check_branch
      %26 = sbr.rel (0) target = $region29
    $region28: #{tpu_custom_call.1} parent=1 // pred_region
      _
    $region29: #{tpu_custom_call.1} parent=1 // pred_fallthru
      _
    %v28 = vld [vmem:[%s0] sm:$0xff]
    %v29 = vld [vmem:[%s0 + $0x8] sm:$0xff]
    %v30 = vld [vmem:[%s0 + $0x10] sm:$0xff]
    %v31 = vld [vmem:[%s0 + $0x18] sm:$0xff]
    %v32 = vld [vmem:[%s0 + $0x20] sm:$0xff]
    %v33 = vld [vmem:[%s0 + $0x28] sm:$0xff]
    %v34 = vld [vmem:[%s0 + $0x30] sm:$0xff]
    %v35 = vld [vmem:[%s0 + $0x38] sm:$0xff]
    %v36 = vld [vmem:[%s0 + $0x40] sm:$0xff]
    %v37 = vld [vmem:[%s0 + $0x48] sm:$0xff]
    %v38 = vld [vmem:[%s0 + $0x50] sm:$0xff]
    %v39 = vld [vmem:[%s0 + $0x58] sm:$0xff]
    %v40 = vld [vmem:[%s0 + $0x60] sm:$0xff]
    %v41 = vld [vmem:[%s0 + $0x68] sm:$0xff]
    %v42 = vld [vmem:[%s0 + $0x70] sm:$0xff]
    %v43 = vld [vmem:[%s0 + $0x78] sm:$0xff]
    %v44 = vld [vmem:[%s0 + $0x80] sm:$0xff]
    %v45 = vld [vmem:[%s0 + $0x88] sm:$0xff]
    %v46 = vld [vmem:[%s0 + $0x90] sm:$0xff]
    %v47 = vld [vmem:[%s0 + $0x98] sm:$0xff]
    %v48 = vld [vmem:[%s0 + $0xa0] sm:$0xff]
    %v49 = vld [vmem:[%s0 + $0xa8] sm:$0xff]
    %v50 = vld [vmem:[%s0 + $0xb0] sm:$0xff]
    %v51 = vld [vmem:[%s0 + $0xb8] sm:$0xff]
    %v52 = vld [vmem:[%s0 + $0xc0] sm:$0xff]
    %v53 = vld [vmem:[%s0 + $0xc8] sm:$0xff]
    %v54 = vld [vmem:[%s0 + $0xd0] sm:$0xff]
    %v55 = vld [vmem:[%s0 + $0xd8] sm:$0xff]
    %v56 = vld [vmem:[%s0 + $0xe0] sm:$0xff]
    %v57 = vld [vmem:[%s0 + $0xe8] sm:$0xff]
    %v58 = vld [vmem:[%s0 + $0xf0] sm:$0xff]
    %v59 = vld [vmem:[%s0 + $0xf8] sm:$0xff]
    %v60 = vlaneseq
    %v61 = vand.u32 %v60, 127
    %62 = vset.pattern.permute.xlu0 0
    %63 = vperm.xlu0 %62, %v28
    %v64 = vpop.permute.xlu0 %63
    %65 = vset.pattern.permute.xlu0 0
    %66 = vperm.xlu0 %65, %v29
    %v67 = vpop.permute.xlu0 %66
    %68 = vset.pattern.permute.xlu0 0
    %69 = vperm.xlu0 %68, %v30
    %v70 = vpop.permute.xlu0 %69
    %71 = vset.pattern.permute.xlu0 0
    %72 = vperm.xlu0 %71, %v31
    %v73 = vpop.permute.xlu0 %72
    %74 = vset.pattern.permute.xlu0 0
    %75 = vperm.xlu0 %74, %v32
    %v76 = vpop.permute.xlu0 %75
    %77 = vset.pattern.permute.xlu0 0
    %78 = vperm.xlu0 %77, %v33
    %v79 = vpop.permute.xlu0 %78
    %80 = vset.pattern.permute.xlu0 0
    %81 = vperm.xlu0 %80, %v34
    %v82 = vpop.permute.xlu0 %81
    %83 = vset.pattern.permute.xlu0 0
    %84 = vperm.xlu0 %83, %v35
    %v85 = vpop.permute.xlu0 %84
    %86 = vset.pattern.permute.xlu0 0
    %87 = vperm.xlu0 %86, %v36
    %v88 = vpop.permute.xlu0 %87
    %89 = vset.pattern.permute.xlu0 0
    %90 = vperm.xlu0 %89, %v37
    %v91 = vpop.permute.xlu0 %90
    %92 = vset.pattern.permute.xlu0 0
    %93 = vperm.xlu0 %92, %v38
    %v94 = vpop.permute.xlu0 %93
    %95 = vset.pattern.permute.xlu0 0
    %96 = vperm.xlu0 %95, %v39
    %v97 = vpop.permute.xlu0 %96
    %98 = vset.pattern.permute.xlu0 0
    %99 = vperm.xlu0 %98, %v40
    %v100 = vpop.permute.xlu0 %99
    %101 = vset.pattern.permute.xlu0 0
    %102 = vperm.xlu0 %101, %v41
    %v103 = vpop.permute.xlu0 %102
    %104 = vset.pattern.permute.xlu0 0
    %105 = vperm.xlu0 %104, %v42
    %v106 = vpop.permute.xlu0 %105
    %107 = vset.pattern.permute.xlu0 0
    %108 = vperm.xlu0 %107, %v43
    %v109 = vpop.permute.xlu0 %108
    %110 = vset.pattern.permute.xlu0 0
    %111 = vperm.xlu0 %110, %v44
    %v112 = vpop.permute.xlu0 %111
    %113 = vset.pattern.permute.xlu0 0
    %114 = vperm.xlu0 %113, %v45
    %v115 = vpop.permute.xlu0 %114
    %116 = vset.pattern.permute.xlu0 0
    %117 = vperm.xlu0 %116, %v46
    %v118 = vpop.permute.xlu0 %117
    %119 = vset.pattern.permute.xlu0 0
    %120 = vperm.xlu0 %119, %v47
    %v121 = vpop.permute.xlu0 %120
    %122 = vset.pattern.permute.xlu0 0
    %123 = vperm.xlu0 %122, %v48
    %v124 = vpop.permute.xlu0 %123
    %125 = vset.pattern.permute.xlu0 0
    %126 = vperm.xlu0 %125, %v49
    %v127 = vpop.permute.xlu0 %126
    %128 = vset.pattern.permute.xlu0 0
    %129 = vperm.xlu0 %128, %v50
    %v130 = vpop.permute.xlu0 %129
    %131 = vset.pattern.permute.xlu0 0
    %132 = vperm.xlu0 %131, %v51
    %v133 = vpop.permute.xlu0 %132
    %134 = vset.pattern.permute.xlu0 0
    %135 = vperm.xlu0 %134, %v52
    %v136 = vpop.permute.xlu0 %135
    %137 = vset.pattern.permute.xlu0 0
    %138 = vperm.xlu0 %137, %v53
    %v139 = vpop.permute.xlu0 %138
    %140 = vset.pattern.permute.xlu0 0
    %141 = vperm.xlu0 %140, %v54
    %v142 = vpop.permute.xlu0 %141
    %143 = vset.pattern.permute.xlu0 0
    %144 = vperm.xlu0 %143, %v55
    %v145 = vpop.permute.xlu0 %144
    %146 = vset.pattern.permute.xlu0 0
    %147 = vperm.xlu0 %146, %v56
    %v148 = vpop.permute.xlu0 %147
    %149 = vset.pattern.permute.xlu0 0
    %150 = vperm.xlu0 %149, %v57
    %v151 = vpop.permute.xlu0 %150
    %152 = vset.pattern.permute.xlu0 0
    %153 = vperm.xlu0 %152, %v58
    %v154 = vpop.permute.xlu0 %153
    %155 = vset.pattern.permute.xlu0 0
    %156 = vperm.xlu0 %155, %v59
    %v157 = vpop.permute.xlu0 %156
    %vm158 = vcmp.eq.s32.totalorder %v61, %v64
    %vm159 = vcmp.eq.s32.totalorder %v61, %v67
    %vm160 = vcmp.eq.s32.totalorder %v61, %v70
    %vm161 = vcmp.eq.s32.totalorder %v61, %v73
    %vm162 = vcmp.eq.s32.totalorder %v61, %v76
    %vm163 = vcmp.eq.s32.totalorder %v61, %v79
    %vm164 = vcmp.eq.s32.totalorder %v61, %v82
    %vm165 = vcmp.eq.s32.totalorder %v61, %v85
    %vm166 = vcmp.eq.s32.totalorder %v61, %v88
    %vm167 = vcmp.eq.s32.totalorder %v61, %v91
    %vm168 = vcmp.eq.s32.totalorder %v61, %v94
    %vm169 = vcmp.eq.s32.totalorder %v61, %v97
    %vm170 = vcmp.eq.s32.totalorder %v61, %v100
    %vm171 = vcmp.eq.s32.totalorder %v61, %v103
    %vm172 = vcmp.eq.s32.totalorder %v61, %v106
    %vm173 = vcmp.eq.s32.totalorder %v61, %v109
    %vm174 = vcmp.eq.s32.totalorder %v61, %v112
    %vm175 = vcmp.eq.s32.totalorder %v61, %v115
    %vm176 = vcmp.eq.s32.totalorder %v61, %v118
    %vm177 = vcmp.eq.s32.totalorder %v61, %v121
    %vm178 = vcmp.eq.s32.totalorder %v61, %v124
    %vm179 = vcmp.eq.s32.totalorder %v61, %v127
    %vm180 = vcmp.eq.s32.totalorder %v61, %v130
    %vm181 = vcmp.eq.s32.totalorder %v61, %v133
    %vm182 = vcmp.eq.s32.totalorder %v61, %v136
    %vm183 = vcmp.eq.s32.totalorder %v61, %v139
    %vm184 = vcmp.eq.s32.totalorder %v61, %v142
    %vm185 = vcmp.eq.s32.totalorder %v61, %v145
    %vm186 = vcmp.eq.s32.totalorder %v61, %v148
    %vm187 = vcmp.eq.s32.totalorder %v61, %v151
    %vm188 = vcmp.eq.s32.totalorder %v61, %v154
    %vm189 = vcmp.eq.s32.totalorder %v61, %v157
    %v190 = vsel %vm158, 1, 0
    %v191 = vsel %vm159, 1, 0
    %v192 = vsel %vm160, 1, 0
    %v193 = vsel %vm161, 1, 0
    %v194 = vsel %vm162, 1, 0
    %v195 = vsel %vm163, 1, 0
    %v196 = vsel %vm164, 1, 0
    %v197 = vsel %vm165, 1, 0
    %v198 = vsel %vm166, 1, 0
    %v199 = vsel %vm167, 1, 0
    %v200 = vsel %vm168, 1, 0
    %v201 = vsel %vm169, 1, 0
    %v202 = vsel %vm170, 1, 0
    %v203 = vsel %vm171, 1, 0
    %v204 = vsel %vm172, 1, 0
    %v205 = vsel %vm173, 1, 0
    %v206 = vsel %vm174, 1, 0
    %v207 = vsel %vm175, 1, 0
    %v208 = vsel %vm176, 1, 0
    %v209 = vsel %vm177, 1, 0
    %v210 = vsel %vm178, 1, 0
    %v211 = vsel %vm179, 1, 0
    %v212 = vsel %vm180, 1, 0
    %v213 = vsel %vm181, 1, 0
    %v214 = vsel %vm182, 1, 0
    %v215 = vsel %vm183, 1, 0
    %v216 = vsel %vm184, 1, 0
    %v217 = vsel %vm185, 1, 0
    %v218 = vsel %vm186, 1, 0
    %v219 = vsel %vm187, 1, 0
    %v220 = vsel %vm188, 1, 0
    %v221 = vsel %vm189, 1, 0
    %v222 = vcvt.s32.f32 %v190
    %v223 = vcvt.s32.f32 %v191
    %v224 = vcvt.s32.f32 %v192
    %v225 = vcvt.s32.f32 %v193
    %v226 = vcvt.s32.f32 %v194
    %v227 = vcvt.s32.f32 %v195
    %v228 = vcvt.s32.f32 %v196
    %v229 = vcvt.s32.f32 %v197
    %v230 = vcvt.s32.f32 %v198
    %v231 = vcvt.s32.f32 %v199
    %v232 = vcvt.s32.f32 %v200
    %v233 = vcvt.s32.f32 %v201
    %v234 = vcvt.s32.f32 %v202
    %v235 = vcvt.s32.f32 %v203
    %v236 = vcvt.s32.f32 %v204
    %v237 = vcvt.s32.f32 %v205
    %v238 = vcvt.s32.f32 %v206
    %v239 = vcvt.s32.f32 %v207
    %v240 = vcvt.s32.f32 %v208
    %v241 = vcvt.s32.f32 %v209
    %v242 = vcvt.s32.f32 %v210
    %v243 = vcvt.s32.f32 %v211
    %v244 = vcvt.s32.f32 %v212
    %v245 = vcvt.s32.f32 %v213
    %v246 = vcvt.s32.f32 %v214
    %v247 = vcvt.s32.f32 %v215
    %v248 = vcvt.s32.f32 %v216
    %v249 = vcvt.s32.f32 %v217
    %v250 = vcvt.s32.f32 %v218
    %v251 = vcvt.s32.f32 %v219
    %v252 = vcvt.s32.f32 %v220
    %v253 = vcvt.s32.f32 %v221
    %v254 = vpack.c.bf16 %v223, %v222
    %v255 = vpack.c.bf16 %v225, %v224
    %v256 = vpack.c.bf16 %v227, %v226
    %v257 = vpack.c.bf16 %v229, %v228
    %v258 = vpack.c.bf16 %v231, %v230
    %v259 = vpack.c.bf16 %v233, %v232
    %v260 = vpack.c.bf16 %v235, %v234
    %v261 = vpack.c.bf16 %v237, %v236
    %v262 = vpack.c.bf16 %v239, %v238
    %v263 = vpack.c.bf16 %v241, %v240
    %v264 = vpack.c.bf16 %v243, %v242
    %v265 = vpack.c.bf16 %v245, %v244
    %v266 = vpack.c.bf16 %v247, %v246
    %v267 = vpack.c.bf16 %v249, %v248
    %v268 = vpack.c.bf16 %v251, %v250
    %v269 = vpack.c.bf16 %v253, %v252
    %v270 = vld [vmem:[%s1] sm:$0xf]
    %v271 = vld [vmem:[%s1 + $0x4] sm:$0xf]
    %v272 = vld [vmem:[%s1 + $0x8] sm:$0xf]
    %v273 = vld [vmem:[%s1 + $0xc] sm:$0xf]
    %v274 = vld [vmem:[%s1 + $0x10] sm:$0xf]
    %v275 = vld [vmem:[%s1 + $0x14] sm:$0xf]
    %v276 = vld [vmem:[%s1 + $0x18] sm:$0xf]
    %v284 = vunpack.c.l.b16 %v270
    %v285 = vunpack.c.l.b16 %v271
    %v286 = vunpack.c.l.b16 %v272
    %v287 = vunpack.c.l.b16 %v273
    %v288 = vunpack.c.l.b16 %v274
    %v289 = vunpack.c.l.b16 %v275
    %v290 = vunpack.c.l.b16 %v276
    %v291 = vpack.c.b16 %v285, %v284
    %v292 = vpack.c.b16 %v287, %v286
    %v293 = vpack.c.b16 %v289, %v288
    %v294 = vpack.c.b16 %v290, %v290
    %vm298 = vcmask 457728
    %v300 = vsel %vm298, %v254, 0
    %v303 = vsel %vm298, %v255, 0
    %v306 = vsel %vm298, %v256, 0
    %v309 = vsel %vm298, %v257, 0
    %v312 = vsel %vm298, %v258, 0
    %v315 = vsel %vm298, %v259, 0
    %v318 = vsel %vm298, %v260, 0
    %v321 = vsel %vm298, %v261, 0
    %v324 = vsel %vm298, %v262, 0
    %v327 = vsel %vm298, %v263, 0
    %v330 = vsel %vm298, %v264, 0
    %v333 = vsel %vm298, %v265, 0
    %v336 = vsel %vm298, %v266, 0
    %v339 = vsel %vm298, %v267, 0
    %v342 = vsel %vm298, %v268, 0
    %v345 = vsel %vm298, %v269, 0
    %vm347 = vcmask 1043456
    %v349 = vsel %vm347, %v294, 0
    %351 = vmatprep.subr.bf16.mxu0 0
    %352 = vmatpush1.bf16.msra.mxu0 %v291
    %353 = vmatprep.subr.bf16.mxu0 0
    %354 = vmatpush1.bf16.msra.mxu0 %v292
    %355 = vmatprep.subr.bf16.mxu0 0
    %356 = vmatpush1.bf16.msra.mxu0 %v293
    %357 = vmatprep.subr.bf16.mxu0 0
    %358 = vmatpush1.bf16.msra.mxu0 %v349
    %359 = vmatprep.subr.bf16.mxu0 0
    %360 = vmatpush1.bf16.msra.mxu0 0
    %361 = vmatprep.subr.bf16.mxu0 0
    %362 = vmatpush1.bf16.msra.mxu0 0
    %363 = vmatprep.subr.bf16.mxu0 0
    %364 = vmatpush1.bf16.msra.mxu0 0
    %365 = vmatprep.subr.bf16.mxu0 0
    %366 = vmatpush1.bf16.msra.mxu0 0
    %367 = vmatprep.subr.bf16.mxu0 0
    %368 = vmatpush1.bf16.msra.mxu0 0
    %369 = vmatprep.subr.bf16.mxu0 0
    %370 = vmatpush1.bf16.msra.mxu0 0
    %371 = vmatprep.subr.bf16.mxu0 0
    %372 = vmatpush1.bf16.msra.mxu0 0
    %373 = vmatprep.subr.bf16.mxu0 0
    %374 = vmatpush1.bf16.msra.mxu0 0
    %375 = vmatprep.subr.bf16.mxu0 0
    %376 = vmatpush1.bf16.msra.mxu0 0
    %377 = vmatprep.subr.bf16.mxu0 0
    %378 = vmatpush1.bf16.msra.mxu0 0
    %379 = vmatprep.subr.bf16.mxu0 0
    %380 = vmatpush1.bf16.msra.mxu0 0
    %381 = vmatprep.subr.bf16.mxu0 0
    %382 = vmatpush1.bf16.msra.mxu0 0
    %383 = vmatprep.mubr.bf16.mxu0 0
    %384 = vmatmul.mubr.bf16.gmra.mrb[0].mxu0 %v300
    %v385 = vpop.f32.mrb[0].mxu0
    %v386 = vadd.f32 0.0, %v385
    %v387 = vpop.f32.mrb[0].mxu0
    %v388 = vpop.f32.mrb[0].mxu0
    %v389 = vadd.f32 0.0, %v388
    %v390 = vpop.f32.mrb[0].mxu0
    %391 = vmatprep.mubr.bf16.mxu0 0
    %392 = vmatmul.mubr.bf16.gmra.mrb[0].mxu0 %v303
    %v393 = vpop.f32.mrb[0].mxu0
    %v394 = vadd.f32 0.0, %v393
    %v395 = vpop.f32.mrb[0].mxu0
    %v396 = vpop.f32.mrb[0].mxu0
    %v397 = vadd.f32 0.0, %v396
    %v398 = vpop.f32.mrb[0].mxu0
    %399 = vmatprep.mubr.bf16.mxu0 0
    %400 = vmatmul.mubr.bf16.gmra.mrb[0].mxu0 %v306
    %v401 = vpop.f32.mrb[0].mxu0
    %v402 = vadd.f32 0.0, %v401
    %v403 = vpop.f32.mrb[0].mxu0
    %v404 = vpop.f32.mrb[0].mxu0
    %v405 = vadd.f32 0.0, %v404
    %v406 = vpop.f32.mrb[0].mxu0
    %407 = vmatprep.mubr.bf16.mxu0 0
    %408 = vmatmul.mubr.bf16.gmra.mrb[0].mxu0 %v309
    %v409 = vpop.f32.mrb[0].mxu0
    %v410 = vadd.f32 0.0, %v409
    %v411 = vpop.f32.mrb[0].mxu0
    %v412 = vpop.f32.mrb[0].mxu0
    %v413 = vadd.f32 0.0, %v412
    %v414 = vpop.f32.mrb[0].mxu0
    %415 = vmatprep.mubr.bf16.mxu0 0
    %416 = vmatmul.mubr.bf16.gmra.mrb[0].mxu0 %v312
    %v417 = vpop.f32.mrb[0].mxu0
    %v418 = vadd.f32 0.0, %v417
    %v419 = vpop.f32.mrb[0].mxu0
    %v420 = vpop.f32.mrb[0].mxu0
    %v421 = vadd.f32 0.0, %v420
    %v422 = vpop.f32.mrb[0].mxu0
    %423 = vmatprep.mubr.bf16.mxu0 0
    %424 = vmatmul.mubr.bf16.gmra.mrb[0].mxu0 %v315
    %v425 = vpop.f32.mrb[0].mxu0
    %v426 = vadd.f32 0.0, %v425
    %v427 = vpop.f32.mrb[0].mxu0
    %v428 = vpop.f32.mrb[0].mxu0
    %v429 = vadd.f32 0.0, %v428
    %v430 = vpop.f32.mrb[0].mxu0
    %431 = vmatprep.mubr.bf16.mxu0 0
    %432 = vmatmul.mubr.bf16.gmra.mrb[0].mxu0 %v318
    %v433 = vpop.f32.mrb[0].mxu0
    %v434 = vadd.f32 0.0, %v433
    %v435 = vpop.f32.mrb[0].mxu0
    %v436 = vpop.f32.mrb[0].mxu0
    %v437 = vadd.f32 0.0, %v436
    %v438 = vpop.f32.mrb[0].mxu0
    %439 = vmatprep.mubr.bf16.mxu0 0
    %440 = vmatmul.mubr.bf16.gmra.mrb[0].mxu0 %v321
    %v441 = vpop.f32.mrb[0].mxu0
    %v442 = vadd.f32 0.0, %v441
    %v443 = vpop.f32.mrb[0].mxu0
    %v444 = vpop.f32.mrb[0].mxu0
    %v445 = vadd.f32 0.0, %v444
    %v446 = vpop.f32.mrb[0].mxu0
    %447 = vmatprep.mubr.bf16.mxu0 0
    %448 = vmatmul.mubr.bf16.gmra.mrb[0].mxu0 %v324
    %v449 = vpop.f32.mrb[0].mxu0
    %v450 = vadd.f32 0.0, %v449
    %v451 = vpop.f32.mrb[0].mxu0
    %v452 = vpop.f32.mrb[0].mxu0
    %v453 = vadd.f32 0.0, %v452
    %v454 = vpop.f32.mrb[0].mxu0
    %455 = vmatprep.mubr.bf16.mxu0 0
    %456 = vmatmul.mubr.bf16.gmra.mrb[0].mxu0 %v327
    %v457 = vpop.f32.mrb[0].mxu0
    %v458 = vadd.f32 0.0, %v457
    %v459 = vpop.f32.mrb[0].mxu0
    %v460 = vpop.f32.mrb[0].mxu0
    %v461 = vadd.f32 0.0, %v460
    %v462 = vpop.f32.mrb[0].mxu0
    %463 = vmatprep.mubr.bf16.mxu0 0
    %464 = vmatmul.mubr.bf16.gmra.mrb[0].mxu0 %v330
    %v465 = vpop.f32.mrb[0].mxu0
    %v466 = vadd.f32 0.0, %v465
    %v467 = vpop.f32.mrb[0].mxu0
    %v468 = vpop.f32.mrb[0].mxu0
    %v469 = vadd.f32 0.0, %v468
    %v470 = vpop.f32.mrb[0].mxu0
    %471 = vmatprep.mubr.bf16.mxu0 0
    %472 = vmatmul.mubr.bf16.gmra.mrb[0].mxu0 %v333
    %v473 = vpop.f32.mrb[0].mxu0
    %v474 = vadd.f32 0.0, %v473
    %v475 = vpop.f32.mrb[0].mxu0
    %v476 = vpop.f32.mrb[0].mxu0
    %v477 = vadd.f32 0.0, %v476
    %v478 = vpop.f32.mrb[0].mxu0
    %479 = vmatprep.mubr.bf16.mxu0 0
    %480 = vmatmul.mubr.bf16.gmra.mrb[0].mxu0 %v336
    %v481 = vpop.f32.mrb[0].mxu0
    %v482 = vadd.f32 0.0, %v481
    %v483 = vpop.f32.mrb[0].mxu0
    %v484 = vpop.f32.mrb[0].mxu0
    %v485 = vadd.f32 0.0, %v484
    %v486 = vpop.f32.mrb[0].mxu0
    %487 = vmatprep.mubr.bf16.mxu0 0
    %488 = vmatmul.mubr.bf16.gmra.mrb[0].mxu0 %v339
    %v489 = vpop.f32.mrb[0].mxu0
    %v490 = vadd.f32 0.0, %v489
    %v491 = vpop.f32.mrb[0].mxu0
    %v492 = vpop.f32.mrb[0].mxu0
    %v493 = vadd.f32 0.0, %v492
    %v494 = vpop.f32.mrb[0].mxu0
    %495 = vmatprep.mubr.bf16.mxu0 0
    %496 = vmatmul.mubr.bf16.gmra.mrb[0].mxu0 %v342
    %v497 = vpop.f32.mrb[0].mxu0
    %v498 = vadd.f32 0.0, %v497
    %v499 = vpop.f32.mrb[0].mxu0
    %v500 = vpop.f32.mrb[0].mxu0
    %v501 = vadd.f32 0.0, %v500
    %v502 = vpop.f32.mrb[0].mxu0
    %503 = vmatprep.mubr.bf16.mxu0 0
    %504 = vmatmul.mubr.bf16.gmra.mrb[0].mxu0 %v345
    %v505 = vpop.f32.mrb[0].mxu0
    %v506 = vadd.f32 0.0, %v505
    %v507 = vpop.f32.mrb[0].mxu0
    %v508 = vpop.f32.mrb[0].mxu0
    %v509 = vadd.f32 0.0, %v508
    %v510 = vpop.f32.mrb[0].mxu0
    %511 = vdwg.mxu0
    %v512 = vpack.c.bf16 %v389, %v386
    %v513 = vpack.c.bf16 %v397, %v394
    %v514 = vpack.c.bf16 %v405, %v402
    %v515 = vpack.c.bf16 %v413, %v410
    %v516 = vpack.c.bf16 %v421, %v418
    %v517 = vpack.c.bf16 %v429, %v426
    %v518 = vpack.c.bf16 %v437, %v434
    %v519 = vpack.c.bf16 %v445, %v442
    %v520 = vpack.c.bf16 %v453, %v450
    %v521 = vpack.c.bf16 %v461, %v458
    %v522 = vpack.c.bf16 %v469, %v466
    %v523 = vpack.c.bf16 %v477, %v474
    %v524 = vpack.c.bf16 %v485, %v482
    %v525 = vpack.c.bf16 %v493, %v490
    %v526 = vpack.c.bf16 %v501, %v498
    %v527 = vpack.c.bf16 %v509, %v506
    %vm528 = vsmask.f32 7424
    %v530 = vshrl.u32 %v512, 16
    %v532 = vshll.u32 %v512, 16
    %v534 = vrot.slane %v532, 1
    %v535 = vor.u32 %v530, %v534
    %v537 = vshll.u32 %v513, 16
    %v539 = vrot.slane %v537, 1
    %v540 = vsel %vm528, %v535, %v539
    %v541 = vshrl.u32 %v513, 16
    %v543 = vor.u32 %v541, %v539
    %v545 = vshll.u32 %v514, 16
    %v547 = vrot.slane %v545, 1
    %v548 = vsel %vm528, %v543, %v547
    %v549 = vshrl.u32 %v514, 16
    %v551 = vor.u32 %v549, %v547
    %v553 = vshll.u32 %v515, 16
    %v555 = vrot.slane %v553, 1
    %v556 = vsel %vm528, %v551, %v555
    %v557 = vshrl.u32 %v515, 16
    %v559 = vor.u32 %v557, %v555
    %v561 = vshll.u32 %v516, 16
    %v563 = vrot.slane %v561, 1
    %v564 = vsel %vm528, %v559, %v563
    %v565 = vshrl.u32 %v516, 16
    %v567 = vor.u32 %v565, %v563
    %v569 = vshll.u32 %v517, 16
    %v571 = vrot.slane %v569, 1
    %v572 = vsel %vm528, %v567, %v571
    %v573 = vshrl.u32 %v517, 16
    %v575 = vor.u32 %v573, %v571
    %v577 = vshll.u32 %v518, 16
    %v579 = vrot.slane %v577, 1
    %v580 = vsel %vm528, %v575, %v579
    %v581 = vshrl.u32 %v518, 16
    %v583 = vor.u32 %v581, %v579
    %v585 = vshll.u32 %v519, 16
    %v587 = vrot.slane %v585, 1
    %v588 = vsel %vm528, %v583, %v587
    %v589 = vshrl.u32 %v519, 16
    %v591 = vor.u32 %v589, %v587
    %v593 = vshll.u32 %v520, 16
    %v595 = vrot.slane %v593, 1
    %v596 = vsel %vm528, %v591, %v595
    %v597 = vshrl.u32 %v520, 16
    %v599 = vor.u32 %v597, %v595
    %v601 = vshll.u32 %v521, 16
    %v603 = vrot.slane %v601, 1
    %v604 = vsel %vm528, %v599, %v603
    %v605 = vshrl.u32 %v521, 16
    %v607 = vor.u32 %v605, %v603
    %v609 = vshll.u32 %v522, 16
    %v611 = vrot.slane %v609, 1
    %v612 = vsel %vm528, %v607, %v611
    %v613 = vshrl.u32 %v522, 16
    %v615 = vor.u32 %v613, %v611
    %v617 = vshll.u32 %v523, 16
    %v619 = vrot.slane %v617, 1
    %v620 = vsel %vm528, %v615, %v619
    %v621 = vshrl.u32 %v523, 16
    %v623 = vor.u32 %v621, %v619
    %v625 = vshll.u32 %v524, 16
    %v627 = vrot.slane %v625, 1
    %v628 = vsel %vm528, %v623, %v627
    %v629 = vshrl.u32 %v524, 16
    %v631 = vor.u32 %v629, %v627
    %v633 = vshll.u32 %v525, 16
    %v635 = vrot.slane %v633, 1
    %v636 = vsel %vm528, %v631, %v635
    %v637 = vshrl.u32 %v525, 16
    %v639 = vor.u32 %v637, %v635
    %v641 = vshll.u32 %v526, 16
    %v643 = vrot.slane %v641, 1
    %v644 = vsel %vm528, %v639, %v643
    %v645 = vshrl.u32 %v526, 16
    %v647 = vor.u32 %v645, %v643
    %v649 = vshll.u32 %v527, 16
    %v651 = vrot.slane %v649, 1
    %v652 = vsel %vm528, %v647, %v651
    %v653 = vshrl.u32 %v527, 16
    %v655 = vor.u32 %v653, %v651
    %v657 = vshll.u32 0, 16
    %v659 = vrot.slane %v657, 1
    %v660 = vsel %vm528, %v655, %v659
    %661 = vrot.lane.b32.xlu0 %v540, 32
    %v662 = vpop.permute.xlu0 %661
    %663 = vrot.lane.b32.xlu0 %v548, 32
    %v664 = vpop.permute.xlu0 %663
    %665 = vrot.lane.b32.xlu0 %v556, 32
    %v666 = vpop.permute.xlu0 %665
    %667 = vrot.lane.b32.xlu0 %v564, 32
    %v668 = vpop.permute.xlu0 %667
    %669 = vrot.lane.b32.xlu0 %v572, 32
    %v670 = vpop.permute.xlu0 %669
    %671 = vrot.lane.b32.xlu0 %v580, 32
    %v672 = vpop.permute.xlu0 %671
    %673 = vrot.lane.b32.xlu0 %v588, 32
    %v674 = vpop.permute.xlu0 %673
    %675 = vrot.lane.b32.xlu0 %v596, 32
    %v676 = vpop.permute.xlu0 %675
    %677 = vrot.lane.b32.xlu0 %v604, 32
    %v678 = vpop.permute.xlu0 %677
    %679 = vrot.lane.b32.xlu0 %v612, 32
    %v680 = vpop.permute.xlu0 %679
    %681 = vrot.lane.b32.xlu0 %v620, 32
    %v682 = vpop.permute.xlu0 %681
    %683 = vrot.lane.b32.xlu0 %v628, 32
    %v684 = vpop.permute.xlu0 %683
    %685 = vrot.lane.b32.xlu0 %v636, 32
    %v686 = vpop.permute.xlu0 %685
    %687 = vrot.lane.b32.xlu0 %v644, 32
    %v688 = vpop.permute.xlu0 %687
    %689 = vrot.lane.b32.xlu0 %v652, 32
    %v690 = vpop.permute.xlu0 %689
    %691 = vrot.lane.b32.xlu0 %v660, 32
    %v692 = vpop.permute.xlu0 %691
    %vm710 = vcmask 1046528
    %v711 = vrot.slane %v512, 1
    %v712 = vrot.slane %v513, 1
    %v713 = vsel %vm710, %v711, %v712
    %v714 = vrot.slane %v514, 1
    %v715 = vsel %vm710, %v712, %v714
    %v716 = vrot.slane %v515, 1
    %v717 = vsel %vm710, %v714, %v716
    %v718 = vrot.slane %v516, 1
    %v719 = vsel %vm710, %v716, %v718
    %v720 = vrot.slane %v517, 1
    %v721 = vsel %vm710, %v718, %v720
    %v722 = vrot.slane %v518, 1
    %v723 = vsel %vm710, %v720, %v722
    %v724 = vrot.slane %v519, 1
    %v725 = vsel %vm710, %v722, %v724
    %v726 = vrot.slane %v520, 1
    %v727 = vsel %vm710, %v724, %v726
    %v728 = vrot.slane %v521, 1
    %v729 = vsel %vm710, %v726, %v728
    %v730 = vrot.slane %v522, 1
    %v731 = vsel %vm710, %v728, %v730
    %v732 = vrot.slane %v523, 1
    %v733 = vsel %vm710, %v730, %v732
    %v734 = vrot.slane %v524, 1
    %v735 = vsel %vm710, %v732, %v734
    %v736 = vrot.slane %v525, 1
    %v737 = vsel %vm710, %v734, %v736
    %v738 = vrot.slane %v526, 1
    %v739 = vsel %vm710, %v736, %v738
    %v740 = vrot.slane %v527, 1
    %v741 = vsel %vm710, %v738, %v740
    %v742 = vrot.slane 0, 1
    %v743 = vsel %vm710, %v740, %v742
    %744 = vrot.lane.b32.xlu0 %v713, 64
    %v745 = vpop.permute.xlu0 %744
    %746 = vrot.lane.b32.xlu0 %v715, 64
    %v747 = vpop.permute.xlu0 %746
    %748 = vrot.lane.b32.xlu0 %v717, 64
    %v749 = vpop.permute.xlu0 %748
    %750 = vrot.lane.b32.xlu0 %v719, 64
    %v751 = vpop.permute.xlu0 %750
    %752 = vrot.lane.b32.xlu0 %v721, 64
    %v753 = vpop.permute.xlu0 %752
    %754 = vrot.lane.b32.xlu0 %v723, 64
    %v755 = vpop.permute.xlu0 %754
    %756 = vrot.lane.b32.xlu0 %v725, 64
    %v757 = vpop.permute.xlu0 %756
    %758 = vrot.lane.b32.xlu0 %v727, 64
    %v759 = vpop.permute.xlu0 %758
    %760 = vrot.lane.b32.xlu0 %v729, 64
    %v761 = vpop.permute.xlu0 %760
    %762 = vrot.lane.b32.xlu0 %v731, 64
    %v763 = vpop.permute.xlu0 %762
    %764 = vrot.lane.b32.xlu0 %v733, 64
    %v765 = vpop.permute.xlu0 %764
    %766 = vrot.lane.b32.xlu0 %v735, 64
    %v767 = vpop.permute.xlu0 %766
    %768 = vrot.lane.b32.xlu0 %v737, 64
    %v769 = vpop.permute.xlu0 %768
    %770 = vrot.lane.b32.xlu0 %v739, 64
    %v771 = vpop.permute.xlu0 %770
    %772 = vrot.lane.b32.xlu0 %v741, 64
    %v773 = vpop.permute.xlu0 %772
    %774 = vrot.lane.b32.xlu0 %v743, 64
    %v775 = vpop.permute.xlu0 %774
    %vm776 = vsmask.f32 6400
    %v777 = vrot.slane %v530, 1
    %v778 = vrot.slane %v532, 2
    %v779 = vor.u32 %v777, %v778
    %v780 = vrot.slane %v541, 1
    %v781 = vrot.slane %v537, 2
    %v782 = vor.u32 %v780, %v781
    %v783 = vsel %vm776, %v779, %v782
    %v784 = vrot.slane %v549, 1
    %v785 = vrot.slane %v545, 2
    %v786 = vor.u32 %v784, %v785
    %v787 = vsel %vm776, %v782, %v786
    %v788 = vrot.slane %v557, 1
    %v789 = vrot.slane %v553, 2
    %v790 = vor.u32 %v788, %v789
    %v791 = vsel %vm776, %v786, %v790
    %v792 = vrot.slane %v565, 1
    %v793 = vrot.slane %v561, 2
    %v794 = vor.u32 %v792, %v793
    %v795 = vsel %vm776, %v790, %v794
    %v796 = vrot.slane %v573, 1
    %v797 = vrot.slane %v569, 2
    %v798 = vor.u32 %v796, %v797
    %v799 = vsel %vm776, %v794, %v798
    %v800 = vrot.slane %v581, 1
    %v801 = vrot.slane %v577, 2
    %v802 = vor.u32 %v800, %v801
    %v803 = vsel %vm776, %v798, %v802
    %v804 = vrot.slane %v589, 1
    %v805 = vrot.slane %v585, 2
    %v806 = vor.u32 %v804, %v805
    %v807 = vsel %vm776, %v802, %v806
    %v808 = vrot.slane %v597, 1
    %v809 = vrot.slane %v593, 2
    %v810 = vor.u32 %v808, %v809
    %v811 = vsel %vm776, %v806, %v810
    %v812 = vrot.slane %v605, 1
    %v813 = vrot.slane %v601, 2
    %v814 = vor.u32 %v812, %v813
    %v815 = vsel %vm776, %v810, %v814
    %v816 = vrot.slane %v613, 1
    %v817 = vrot.slane %v609, 2
    %v818 = vor.u32 %v816, %v817
    %v819 = vsel %vm776, %v814, %v818
    %v820 = vrot.slane %v621, 1
    %v821 = vrot.slane %v617, 2
    %v822 = vor.u32 %v820, %v821
    %v823 = vsel %vm776, %v818, %v822
    %v824 = vrot.slane %v629, 1
    %v825 = vrot.slane %v625, 2
    %v826 = vor.u32 %v824, %v825
    %v827 = vsel %vm776, %v822, %v826
    %v828 = vrot.slane %v637, 1
    %v829 = vrot.slane %v633, 2
    %v830 = vor.u32 %v828, %v829
    %v831 = vsel %vm776, %v826, %v830
    %v832 = vrot.slane %v645, 1
    %v833 = vrot.slane %v641, 2
    %v834 = vor.u32 %v832, %v833
    %v835 = vsel %vm776, %v830, %v834
    %v836 = vrot.slane %v653, 1
    %v837 = vrot.slane %v649, 2
    %v838 = vor.u32 %v836, %v837
    %v839 = vsel %vm776, %v834, %v838
    %v840 = vshrl.u32 0, 16
    %v842 = vrot.slane %v840, 1
    %v843 = vrot.slane %v657, 2
    %v844 = vor.u32 %v842, %v843
    %v845 = vsel %vm776, %v838, %v844
    %846 = vrot.lane.b32.xlu0 %v783, 96
    %v847 = vpop.permute.xlu0 %846
    %848 = vrot.lane.b32.xlu0 %v787, 96
    %v849 = vpop.permute.xlu0 %848
    %850 = vrot.lane.b32.xlu0 %v791, 96
    %v851 = vpop.permute.xlu0 %850
    %852 = vrot.lane.b32.xlu0 %v795, 96
    %v853 = vpop.permute.xlu0 %852
    %854 = vrot.lane.b32.xlu0 %v799, 96
    %v855 = vpop.permute.xlu0 %854
    %856 = vrot.lane.b32.xlu0 %v803, 96
    %v857 = vpop.permute.xlu0 %856
    %858 = vrot.lane.b32.xlu0 %v807, 96
    %v859 = vpop.permute.xlu0 %858
    %860 = vrot.lane.b32.xlu0 %v811, 96
    %v861 = vpop.permute.xlu0 %860
    %862 = vrot.lane.b32.xlu0 %v815, 96
    %v863 = vpop.permute.xlu0 %862
    %864 = vrot.lane.b32.xlu0 %v819, 96
    %v865 = vpop.permute.xlu0 %864
    %866 = vrot.lane.b32.xlu0 %v823, 96
    %v867 = vpop.permute.xlu0 %866
    %868 = vrot.lane.b32.xlu0 %v827, 96
    %v869 = vpop.permute.xlu0 %868
    %870 = vrot.lane.b32.xlu0 %v831, 96
    %v871 = vpop.permute.xlu0 %870
    %872 = vrot.lane.b32.xlu0 %v835, 96
    %v873 = vpop.permute.xlu0 %872
    %874 = vrot.lane.b32.xlu0 %v839, 96
    %v875 = vpop.permute.xlu0 %874
    %876 = vrot.lane.b32.xlu0 %v845, 96
    %v877 = vpop.permute.xlu0 %876
    %vm878 = vcmask 1045504
    %v879 = vrot.slane %v512, 2
    %v880 = vrot.slane %v513, 2
    %v881 = vsel %vm878, %v879, %v880
    %v882 = vrot.slane %v514, 2
    %v883 = vsel %vm878, %v880, %v882
    %v884 = vrot.slane %v515, 2
    %v885 = vsel %vm878, %v882, %v884
    %v886 = vrot.slane %v516, 2
    %v887 = vsel %vm878, %v884, %v886
    %v888 = vrot.slane %v517, 2
    %v889 = vsel %vm878, %v886, %v888
    %v890 = vrot.slane %v518, 2
    %v891 = vsel %vm878, %v888, %v890
    %v892 = vrot.slane %v519, 2
    %v893 = vsel %vm878, %v890, %v892
    %v894 = vrot.slane %v520, 2
    %v895 = vsel %vm878, %v892, %v894
    %v896 = vrot.slane %v521, 2
    %v897 = vsel %vm878, %v894, %v896
    %v898 = vrot.slane %v522, 2
    %v899 = vsel %vm878, %v896, %v898
    %v900 = vrot.slane %v523, 2
    %v901 = vsel %vm878, %v898, %v900
    %v902 = vrot.slane %v524, 2
    %v903 = vsel %vm878, %v900, %v902
    %v904 = vrot.slane %v525, 2
    %v905 = vsel %vm878, %v902, %v904
    %v906 = vrot.slane %v526, 2
    %v907 = vsel %vm878, %v904, %v906
    %v908 = vrot.slane %v527, 2
    %v909 = vsel %vm878, %v906, %v908
    %v910 = vrot.slane 0, 2
    %v911 = vsel %vm878, %v908, %v910
    %vm912 = vcmask 261120
    %v914 = vsel %vm912, %v512, %v662
    %v916 = vsel %vm912, %v513, %v664
    %v918 = vsel %vm912, %v514, %v666
    %v920 = vsel %vm912, %v515, %v668
    %v922 = vsel %vm912, %v516, %v670
    %v924 = vsel %vm912, %v517, %v672
    %v926 = vsel %vm912, %v518, %v674
    %v928 = vsel %vm912, %v519, %v676
    %v930 = vsel %vm912, %v520, %v678
    %v932 = vsel %vm912, %v521, %v680
    %v934 = vsel %vm912, %v522, %v682
    %v936 = vsel %vm912, %v523, %v684
    %v938 = vsel %vm912, %v524, %v686
    %v940 = vsel %vm912, %v525, %v688
    %v942 = vsel %vm912, %v526, %v690
    %v944 = vsel %vm912, %v527, %v692
    %vm945 = vcmask 523264
    %v947 = vsel %vm945, %v914, %v745
    %v949 = vsel %vm945, %v916, %v747
    %v951 = vsel %vm945, %v918, %v749
    %v953 = vsel %vm945, %v920, %v751
    %v955 = vsel %vm945, %v922, %v753
    %v957 = vsel %vm945, %v924, %v755
    %v959 = vsel %vm945, %v926, %v757
    %v961 = vsel %vm945, %v928, %v759
    %v963 = vsel %vm945, %v930, %v761
    %v965 = vsel %vm945, %v932, %v763
    %v967 = vsel %vm945, %v934, %v765
    %v969 = vsel %vm945, %v936, %v767
    %v971 = vsel %vm945, %v938, %v769
    %v973 = vsel %vm945, %v940, %v771
    %v975 = vsel %vm945, %v942, %v773
    %v977 = vsel %vm945, %v944, %v775
    %vm978 = vcmask 785408
    %v980 = vsel %vm978, %v947, %v847
    %v983 = vsel %vm978, %v949, %v849
    %v986 = vsel %vm978, %v951, %v851
    %v989 = vsel %vm978, %v953, %v853
    %v992 = vsel %vm978, %v955, %v855
    %v995 = vsel %vm978, %v957, %v857
    %v998 = vsel %vm978, %v959, %v859
    %v1001 = vsel %vm978, %v961, %v861
    %v1004 = vsel %vm978, %v963, %v863
    %v1007 = vsel %vm978, %v965, %v865
    %v1010 = vsel %vm978, %v967, %v867
    %v1013 = vsel %vm978, %v969, %v869
    %v1016 = vsel %vm978, %v971, %v871
    %v1019 = vsel %vm978, %v973, %v873
    %v1022 = vsel %vm978, %v975, %v875
    %v1025 = vsel %vm978, %v977, %v877
    %v1027 = vld [vmem:[%s2] sm:$0xf]
    %v1028 = vld [vmem:[%s2 + $0x4] sm:$0xf]
    %v1029 = vld [vmem:[%s2 + $0x8] sm:$0xf]
    %v1030 = vld [vmem:[%s2 + $0xc] sm:$0xf]
    %v1031 = vld [vmem:[%s2 + $0x10] sm:$0xf]
    %v1032 = vld [vmem:[%s2 + $0x14] sm:$0xf]
    %v1033 = vld [vmem:[%s2 + $0x18] sm:$0xf]
    %v1034 = vld [vmem:[%s2 + $0x1c] sm:$0xf]
    %v1035 = vld [vmem:[%s2 + $0x20] sm:$0xf]
    %v1036 = vld [vmem:[%s2 + $0x24] sm:$0xf]
    %v1037 = vld [vmem:[%s2 + $0x28] sm:$0xf]
    %v1038 = vld [vmem:[%s2 + $0x2c] sm:$0xf]
    %v1039 = vld [vmem:[%s2 + $0x30] sm:$0xf]
    %v1040 = vld [vmem:[%s2 + $0x34] sm:$0xf]
    %v1041 = vld [vmem:[%s2 + $0x38] sm:$0xf]
    %v1042 = vld [vmem:[%s2 + $0x3c] sm:$0xf]
    %v1043 = vld [vmem:[%s2 + $0x40] sm:$0xf]
    %v1044 = vld [vmem:[%s2 + $0x44] sm:$0xf]
    %v1045 = vld [vmem:[%s2 + $0x48] sm:$0xf]
    %v1046 = vld [vmem:[%s2 + $0x4c] sm:$0xf]
    %v1067 = vunpack.c.l.b16 %v1027
    %v1068 = vunpack.c.l.b16 %v1028
    %v1069 = vunpack.c.l.b16 %v1029
    %v1070 = vunpack.c.l.b16 %v1030
    %v1071 = vunpack.c.l.b16 %v1031
    %v1072 = vunpack.c.l.b16 %v1032
    %v1073 = vunpack.c.l.b16 %v1033
    %v1074 = vunpack.c.l.b16 %v1034
    %v1075 = vunpack.c.l.b16 %v1035
    %v1076 = vunpack.c.l.b16 %v1036
    %v1077 = vunpack.c.l.b16 %v1037
    %v1078 = vunpack.c.l.b16 %v1038
    %v1079 = vunpack.c.l.b16 %v1039
    %v1080 = vunpack.c.l.b16 %v1040
    %v1081 = vunpack.c.l.b16 %v1041
    %v1082 = vunpack.c.l.b16 %v1042
    %v1083 = vunpack.c.l.b16 %v1043
    %v1084 = vunpack.c.l.b16 %v1044
    %v1085 = vunpack.c.l.b16 %v1045
    %v1086 = vunpack.c.l.b16 %v1046
    %v1087 = vpack.c.b16 %v1068, %v1067
    %v1088 = vpack.c.b16 %v1070, %v1069
    %v1089 = vpack.c.b16 %v1072, %v1071
    %v1090 = vpack.c.b16 %v1074, %v1073
    %v1091 = vpack.c.b16 %v1076, %v1075
    %v1092 = vpack.c.b16 %v1078, %v1077
    %v1093 = vpack.c.b16 %v1080, %v1079
    %v1094 = vpack.c.b16 %v1082, %v1081
    %v1095 = vpack.c.b16 %v1084, %v1083
    %v1096 = vpack.c.b16 %v1086, %v1085
    %v1108 = vsel %vm912, %v881, 0
    %v1111 = vsel %vm912, %v883, 0
    %v1114 = vsel %vm912, %v885, 0
    %v1117 = vsel %vm912, %v887, 0
    %v1120 = vsel %vm912, %v889, 0
    %v1123 = vsel %vm912, %v891, 0
    %v1126 = vsel %vm912, %v893, 0
    %v1129 = vsel %vm912, %v895, 0
    %v1132 = vsel %vm912, %v897, 0
    %v1135 = vsel %vm912, %v899, 0
    %v1138 = vsel %vm912, %v901, 0
    %v1141 = vsel %vm912, %v903, 0
    %v1144 = vsel %vm912, %v905, 0
    %v1147 = vsel %vm912, %v907, 0
    %v1150 = vsel %vm912, %v909, 0
    %v1153 = vsel %vm912, %v911, 0
    %1155 = vmatprep.subr.bf16.mxu0 0
    %1156 = vmatpush1.bf16.msra.mxu0 %v1087
    %1157 = vmatprep.subr.bf16.mxu0 0
    %1158 = vmatpush1.bf16.msra.mxu0 %v1088
    %1159 = vmatprep.subr.bf16.mxu0 0
    %1160 = vmatpush1.bf16.msra.mxu0 %v1089
    %1161 = vmatprep.subr.bf16.mxu0 0
    %1162 = vmatpush1.bf16.msra.mxu0 %v1090
    %1163 = vmatprep.subr.bf16.mxu0 0
    %1164 = vmatpush1.bf16.msra.mxu0 %v1091
    %1165 = vmatprep.subr.bf16.mxu0 0
    %1166 = vmatpush1.bf16.msra.mxu0 %v1092
    %1167 = vmatprep.subr.bf16.mxu0 0
    %1168 = vmatpush1.bf16.msra.mxu0 %v1093
    %1169 = vmatprep.subr.bf16.mxu0 0
    %1170 = vmatpush1.bf16.msra.mxu0 %v1094
    %1171 = vmatprep.subr.bf16.mxu0 0
    %1172 = vmatpush1.bf16.msra.mxu0 %v1095
    %1173 = vmatprep.subr.bf16.mxu0 0
    %1174 = vmatpush1.bf16.msra.mxu0 %v1096
    %1175 = vmatprep.subr.bf16.mxu0 0
    %1176 = vmatpush1.bf16.msra.mxu0 0
    %1177 = vmatprep.subr.bf16.mxu0 0
    %1178 = vmatpush1.bf16.msra.mxu0 0
    %1179 = vmatprep.subr.bf16.mxu0 0
    %1180 = vmatpush1.bf16.msra.mxu0 0
    %1181 = vmatprep.subr.bf16.mxu0 0
    %1182 = vmatpush1.bf16.msra.mxu0 0
    %1183 = vmatprep.subr.bf16.mxu0 0
    %1184 = vmatpush1.bf16.msra.mxu0 0
    %1185 = vmatprep.subr.bf16.mxu0 0
    %1186 = vmatpush1.bf16.msra.mxu0 0
    %1187 = vmatprep.mubr.bf16.mxu0 %v1108
    %1188 = vmatmul.mubr.bf16.gmra.mrb[0].mxu0 %v980
    %v1189 = vpop.f32.mrb[0].mxu0
    %v1190 = vadd.f32 0.0, %v1189
    %v1191 = vpop.f32.mrb[0].mxu0
    %v1192 = vpop.f32.mrb[0].mxu0
    %v1193 = vadd.f32 0.0, %v1192
    %v1194 = vpop.f32.mrb[0].mxu0
    %1195 = vmatprep.mubr.bf16.mxu0 %v1111
    %1196 = vmatmul.mubr.bf16.gmra.mrb[0].mxu0 %v983
    %v1197 = vpop.f32.mrb[0].mxu0
    %v1198 = vadd.f32 0.0, %v1197
    %v1199 = vpop.f32.mrb[0].mxu0
    %v1200 = vpop.f32.mrb[0].mxu0
    %v1201 = vadd.f32 0.0, %v1200
    %v1202 = vpop.f32.mrb[0].mxu0
    %1203 = vmatprep.mubr.bf16.mxu0 %v1114
    %1204 = vmatmul.mubr.bf16.gmra.mrb[0].mxu0 %v986
    %v1205 = vpop.f32.mrb[0].mxu0
    %v1206 = vadd.f32 0.0, %v1205
    %v1207 = vpop.f32.mrb[0].mxu0
    %v1208 = vpop.f32.mrb[0].mxu0
    %v1209 = vadd.f32 0.0, %v1208
    %v1210 = vpop.f32.mrb[0].mxu0
    %1211 = vmatprep.mubr.bf16.mxu0 %v1117
    %1212 = vmatmul.mubr.bf16.gmra.mrb[0].mxu0 %v989
    %v1213 = vpop.f32.mrb[0].mxu0
    %v1214 = vadd.f32 0.0, %v1213
    %v1215 = vpop.f32.mrb[0].mxu0
    %v1216 = vpop.f32.mrb[0].mxu0
    %v1217 = vadd.f32 0.0, %v1216
    %v1218 = vpop.f32.mrb[0].mxu0
    %1219 = vmatprep.mubr.bf16.mxu0 %v1120
    %1220 = vmatmul.mubr.bf16.gmra.mrb[0].mxu0 %v992
    %v1221 = vpop.f32.mrb[0].mxu0
    %v1222 = vadd.f32 0.0, %v1221
    %v1223 = vpop.f32.mrb[0].mxu0
    %v1224 = vpop.f32.mrb[0].mxu0
    %v1225 = vadd.f32 0.0, %v1224
    %v1226 = vpop.f32.mrb[0].mxu0
    %1227 = vmatprep.mubr.bf16.mxu0 %v1123
    %1228 = vmatmul.mubr.bf16.gmra.mrb[0].mxu0 %v995
    %v1229 = vpop.f32.mrb[0].mxu0
    %v1230 = vadd.f32 0.0, %v1229
    %v1231 = vpop.f32.mrb[0].mxu0
    %v1232 = vpop.f32.mrb[0].mxu0
    %v1233 = vadd.f32 0.0, %v1232
    %v1234 = vpop.f32.mrb[0].mxu0
    %1235 = vmatprep.mubr.bf16.mxu0 %v1126
    %1236 = vmatmul.mubr.bf16.gmra.mrb[0].mxu0 %v998
    %v1237 = vpop.f32.mrb[0].mxu0
    %v1238 = vadd.f32 0.0, %v1237
    %v1239 = vpop.f32.mrb[0].mxu0
    %v1240 = vpop.f32.mrb[0].mxu0
    %v1241 = vadd.f32 0.0, %v1240
    %v1242 = vpop.f32.mrb[0].mxu0
    %1243 = vmatprep.mubr.bf16.mxu0 %v1129
    %1244 = vmatmul.mubr.bf16.gmra.mrb[0].mxu0 %v1001
    %v1245 = vpop.f32.mrb[0].mxu0
    %v1246 = vadd.f32 0.0, %v1245
    %v1247 = vpop.f32.mrb[0].mxu0
    %v1248 = vpop.f32.mrb[0].mxu0
    %v1249 = vadd.f32 0.0, %v1248
    %v1250 = vpop.f32.mrb[0].mxu0
    %1251 = vmatprep.mubr.bf16.mxu0 %v1132
    %1252 = vmatmul.mubr.bf16.gmra.mrb[0].mxu0 %v1004
    %v1253 = vpop.f32.mrb[0].mxu0
    %v1254 = vadd.f32 0.0, %v1253
    %v1255 = vpop.f32.mrb[0].mxu0
    %v1256 = vpop.f32.mrb[0].mxu0
    %v1257 = vadd.f32 0.0, %v1256
    %v1258 = vpop.f32.mrb[0].mxu0
    %1259 = vmatprep.mubr.bf16.mxu0 %v1135
    %1260 = vmatmul.mubr.bf16.gmra.mrb[0].mxu0 %v1007
    %v1261 = vpop.f32.mrb[0].mxu0
    %v1262 = vadd.f32 0.0, %v1261
    %v1263 = vpop.f32.mrb[0].mxu0
    %v1264 = vpop.f32.mrb[0].mxu0
    %v1265 = vadd.f32 0.0, %v1264
    %v1266 = vpop.f32.mrb[0].mxu0
    %1267 = vmatprep.mubr.bf16.mxu0 %v1138
    %1268 = vmatmul.mubr.bf16.gmra.mrb[0].mxu0 %v1010
    %v1269 = vpop.f32.mrb[0].mxu0
    %v1270 = vadd.f32 0.0, %v1269
    %v1271 = vpop.f32.mrb[0].mxu0
    %v1272 = vpop.f32.mrb[0].mxu0
    %v1273 = vadd.f32 0.0, %v1272
    %v1274 = vpop.f32.mrb[0].mxu0
    %1275 = vmatprep.mubr.bf16.mxu0 %v1141
    %1276 = vmatmul.mubr.bf16.gmra.mrb[0].mxu0 %v1013
    %v1277 = vpop.f32.mrb[0].mxu0
    %v1278 = vadd.f32 0.0, %v1277
    %v1279 = vpop.f32.mrb[0].mxu0
    %v1280 = vpop.f32.mrb[0].mxu0
    %v1281 = vadd.f32 0.0, %v1280
    %v1282 = vpop.f32.mrb[0].mxu0
    %1283 = vmatprep.mubr.bf16.mxu0 %v1144
    %1284 = vmatmul.mubr.bf16.gmra.mrb[0].mxu0 %v1016
    %v1285 = vpop.f32.mrb[0].mxu0
    %v1286 = vadd.f32 0.0, %v1285
    %v1287 = vpop.f32.mrb[0].mxu0
    %v1288 = vpop.f32.mrb[0].mxu0
    %v1289 = vadd.f32 0.0, %v1288
    %v1290 = vpop.f32.mrb[0].mxu0
    %1291 = vmatprep.mubr.bf16.mxu0 %v1147
    %1292 = vmatmul.mubr.bf16.gmra.mrb[0].mxu0 %v1019
    %v1293 = vpop.f32.mrb[0].mxu0
    %v1294 = vadd.f32 0.0, %v1293
    %v1295 = vpop.f32.mrb[0].mxu0
    %v1296 = vpop.f32.mrb[0].mxu0
    %v1297 = vadd.f32 0.0, %v1296
    %v1298 = vpop.f32.mrb[0].mxu0
    %1299 = vmatprep.mubr.bf16.mxu0 %v1150
    %1300 = vmatmul.mubr.bf16.gmra.mrb[0].mxu0 %v1022
    %v1301 = vpop.f32.mrb[0].mxu0
    %v1302 = vadd.f32 0.0, %v1301
    %v1303 = vpop.f32.mrb[0].mxu0
    %v1304 = vpop.f32.mrb[0].mxu0
    %v1305 = vadd.f32 0.0, %v1304
    %v1306 = vpop.f32.mrb[0].mxu0
    %1307 = vmatprep.mubr.bf16.mxu0 %v1153
    %1308 = vmatmul.mubr.bf16.gmra.mrb[0].mxu0 %v1025
    %v1309 = vpop.f32.mrb[0].mxu0
    %v1310 = vadd.f32 0.0, %v1309
    %v1311 = vpop.f32.mrb[0].mxu0
    %v1312 = vpop.f32.mrb[0].mxu0
    %v1313 = vadd.f32 0.0, %v1312
    %v1314 = vpop.f32.mrb[0].mxu0
    %1315 = vdwg.mxu0
    %v1316 = vld [vmem:[%s4] sm:$0xff]
    %v1317 = vld [vmem:[%s4 + $0x8] sm:$0xff]
    %v1318 = vadd.f32 %v1190, %v1316
    %v1319 = vadd.f32 %v1193, %v1317
    %v1320 = vadd.f32 %v1198, %v1316
    %v1321 = vadd.f32 %v1201, %v1317
    %v1322 = vadd.f32 %v1206, %v1316
    %v1323 = vadd.f32 %v1209, %v1317
    %v1324 = vadd.f32 %v1214, %v1316
    %v1325 = vadd.f32 %v1217, %v1317
    %v1326 = vadd.f32 %v1222, %v1316
    %v1327 = vadd.f32 %v1225, %v1317
    %v1328 = vadd.f32 %v1230, %v1316
    %v1329 = vadd.f32 %v1233, %v1317
    %v1330 = vadd.f32 %v1238, %v1316
    %v1331 = vadd.f32 %v1241, %v1317
    %v1332 = vadd.f32 %v1246, %v1316
    %v1333 = vadd.f32 %v1249, %v1317
    %v1334 = vadd.f32 %v1254, %v1316
    %v1335 = vadd.f32 %v1257, %v1317
    %v1336 = vadd.f32 %v1262, %v1316
    %v1337 = vadd.f32 %v1265, %v1317
    %v1338 = vadd.f32 %v1270, %v1316
    %v1339 = vadd.f32 %v1273, %v1317
    %v1340 = vadd.f32 %v1278, %v1316
    %v1341 = vadd.f32 %v1281, %v1317
    %v1342 = vadd.f32 %v1286, %v1316
    %v1343 = vadd.f32 %v1289, %v1317
    %v1344 = vadd.f32 %v1294, %v1316
    %v1345 = vadd.f32 %v1297, %v1317
    %v1346 = vadd.f32 %v1302, %v1316
    %v1347 = vadd.f32 %v1305, %v1317
    %v1348 = vadd.f32 %v1310, %v1316
    %v1349 = vadd.f32 %v1313, %v1317
    %v1350 = vmax.f32 %v1318, %v1319
    %v1351 = vrot.slane %v1350, 4
    %v1352 = vmax.f32 %v1350, %v1351
    %v1353 = vrot.slane %v1352, 2
    %v1354 = vmax.f32 %v1352, %v1353
    %v1355 = vrot.slane %v1354, 1
    %v1356 = vmax.f32 %v1354, %v1355
    %v1357 = vmax.f32 %v1320, %v1321
    %v1358 = vrot.slane %v1357, 4
    %v1359 = vmax.f32 %v1357, %v1358
    %v1360 = vrot.slane %v1359, 2
    %v1361 = vmax.f32 %v1359, %v1360
    %v1362 = vrot.slane %v1361, 1
    %v1363 = vmax.f32 %v1361, %v1362
    %v1364 = vmax.f32 %v1322, %v1323
    %v1365 = vrot.slane %v1364, 4
    %v1366 = vmax.f32 %v1364, %v1365
    %v1367 = vrot.slane %v1366, 2
    %v1368 = vmax.f32 %v1366, %v1367
    %v1369 = vrot.slane %v1368, 1
    %v1370 = vmax.f32 %v1368, %v1369
    %v1371 = vmax.f32 %v1324, %v1325
    %v1372 = vrot.slane %v1371, 4
    %v1373 = vmax.f32 %v1371, %v1372
    %v1374 = vrot.slane %v1373, 2
    %v1375 = vmax.f32 %v1373, %v1374
    %v1376 = vrot.slane %v1375, 1
    %v1377 = vmax.f32 %v1375, %v1376
    %v1378 = vmax.f32 %v1326, %v1327
    %v1379 = vrot.slane %v1378, 4
    %v1380 = vmax.f32 %v1378, %v1379
    %v1381 = vrot.slane %v1380, 2
    %v1382 = vmax.f32 %v1380, %v1381
    %v1383 = vrot.slane %v1382, 1
    %v1384 = vmax.f32 %v1382, %v1383
    %v1385 = vmax.f32 %v1328, %v1329
    %v1386 = vrot.slane %v1385, 4
    %v1387 = vmax.f32 %v1385, %v1386
    %v1388 = vrot.slane %v1387, 2
    %v1389 = vmax.f32 %v1387, %v1388
    %v1390 = vrot.slane %v1389, 1
    %v1391 = vmax.f32 %v1389, %v1390
    %v1392 = vmax.f32 %v1330, %v1331
    %v1393 = vrot.slane %v1392, 4
    %v1394 = vmax.f32 %v1392, %v1393
    %v1395 = vrot.slane %v1394, 2
    %v1396 = vmax.f32 %v1394, %v1395
    %v1397 = vrot.slane %v1396, 1
    %v1398 = vmax.f32 %v1396, %v1397
    %v1399 = vmax.f32 %v1332, %v1333
    %v1400 = vrot.slane %v1399, 4
    %v1401 = vmax.f32 %v1399, %v1400
    %v1402 = vrot.slane %v1401, 2
    %v1403 = vmax.f32 %v1401, %v1402
    %v1404 = vrot.slane %v1403, 1
    %v1405 = vmax.f32 %v1403, %v1404
    %v1406 = vmax.f32 %v1334, %v1335
    %v1407 = vrot.slane %v1406, 4
    %v1408 = vmax.f32 %v1406, %v1407
    %v1409 = vrot.slane %v1408, 2
    %v1410 = vmax.f32 %v1408, %v1409
    %v1411 = vrot.slane %v1410, 1
    %v1412 = vmax.f32 %v1410, %v1411
    %v1413 = vmax.f32 %v1336, %v1337
    %v1414 = vrot.slane %v1413, 4
    %v1415 = vmax.f32 %v1413, %v1414
    %v1416 = vrot.slane %v1415, 2
    %v1417 = vmax.f32 %v1415, %v1416
    %v1418 = vrot.slane %v1417, 1
    %v1419 = vmax.f32 %v1417, %v1418
    %v1420 = vmax.f32 %v1338, %v1339
    %v1421 = vrot.slane %v1420, 4
    %v1422 = vmax.f32 %v1420, %v1421
    %v1423 = vrot.slane %v1422, 2
    %v1424 = vmax.f32 %v1422, %v1423
    %v1425 = vrot.slane %v1424, 1
    %v1426 = vmax.f32 %v1424, %v1425
    %v1427 = vmax.f32 %v1340, %v1341
    %v1428 = vrot.slane %v1427, 4
    %v1429 = vmax.f32 %v1427, %v1428
    %v1430 = vrot.slane %v1429, 2
    %v1431 = vmax.f32 %v1429, %v1430
    %v1432 = vrot.slane %v1431, 1
    %v1433 = vmax.f32 %v1431, %v1432
    %v1434 = vmax.f32 %v1342, %v1343
    %v1435 = vrot.slane %v1434, 4
    %v1436 = vmax.f32 %v1434, %v1435
    %v1437 = vrot.slane %v1436, 2
    %v1438 = vmax.f32 %v1436, %v1437
    %v1439 = vrot.slane %v1438, 1
    %v1440 = vmax.f32 %v1438, %v1439
    %v1441 = vmax.f32 %v1344, %v1345
    %v1442 = vrot.slane %v1441, 4
    %v1443 = vmax.f32 %v1441, %v1442
    %v1444 = vrot.slane %v1443, 2
    %v1445 = vmax.f32 %v1443, %v1444
    %v1446 = vrot.slane %v1445, 1
    %v1447 = vmax.f32 %v1445, %v1446
    %v1448 = vmax.f32 %v1346, %v1347
    %v1449 = vrot.slane %v1448, 4
    %v1450 = vmax.f32 %v1448, %v1449
    %v1451 = vrot.slane %v1450, 2
    %v1452 = vmax.f32 %v1450, %v1451
    %v1453 = vrot.slane %v1452, 1
    %v1454 = vmax.f32 %v1452, %v1453
    %v1455 = vmax.f32 %v1348, %v1349
    %v1456 = vrot.slane %v1455, 4
    %v1457 = vmax.f32 %v1455, %v1456
    %v1458 = vrot.slane %v1457, 2
    %v1459 = vmax.f32 %v1457, %v1458
    %v1460 = vrot.slane %v1459, 1
    %v1461 = vmax.f32 %v1459, %v1460
    %v1462 = vld [vmem:[%s3] sm:$0x1]
    %v1464 = vlaneseq
    %v1465 = vshrl.u32 %v1464, 7
    %v1466 = vsub.s32 0, %v1465
    %v1467 = vrot.slane %v1462, %v1466
    %v1469 = vadd.f32 %v1356, %v1467
    %v1470 = vadd.f32 %v1363, %v1467
    %v1471 = vadd.f32 %v1370, %v1467
    %v1472 = vadd.f32 %v1377, %v1467
    %v1473 = vadd.f32 %v1384, %v1467
    %v1474 = vadd.f32 %v1391, %v1467
    %v1475 = vadd.f32 %v1398, %v1467
    %v1476 = vadd.f32 %v1405, %v1467
    %v1477 = vadd.f32 %v1412, %v1467
    %v1478 = vadd.f32 %v1419, %v1467
    %v1479 = vadd.f32 %v1426, %v1467
    %v1480 = vadd.f32 %v1433, %v1467
    %v1481 = vadd.f32 %v1440, %v1467
    %v1482 = vadd.f32 %v1447, %v1467
    %v1483 = vadd.f32 %v1454, %v1467
    %v1484 = vadd.f32 %v1461, %v1467
    %v1485 = vmax.f32 %v1469, 0.0
    %v1486 = vmax.f32 %v1470, 0.0
    %v1487 = vmax.f32 %v1471, 0.0
    %v1488 = vmax.f32 %v1472, 0.0
    %v1489 = vmax.f32 %v1473, 0.0
    %v1490 = vmax.f32 %v1474, 0.0
    %v1491 = vmax.f32 %v1475, 0.0
    %v1492 = vmax.f32 %v1476, 0.0
    %v1493 = vmax.f32 %v1477, 0.0
    %v1494 = vmax.f32 %v1478, 0.0
    %v1495 = vmax.f32 %v1479, 0.0
    %v1496 = vmax.f32 %v1480, 0.0
    %v1497 = vmax.f32 %v1481, 0.0
    %v1498 = vmax.f32 %v1482, 0.0
    %v1499 = vmax.f32 %v1483, 0.0
    %v1500 = vmax.f32 %v1484, 0.0
    %v1501 = vld [vmem:[%s5] sm:$0xff]
    %v1502 = vld [vmem:[%s5 + $0x8] sm:$0xff]
    %v1503 = vld [vmem:[%s5 + $0x10] sm:$0xff]
    %v1504 = vld [vmem:[%s5 + $0x18] sm:$0xff]
    %v1505 = vld [vmem:[%s5 + $0x20] sm:$0xff]
    %v1506 = vld [vmem:[%s5 + $0x28] sm:$0xff]
    %v1507 = vld [vmem:[%s5 + $0x30] sm:$0xff]
    %v1508 = vld [vmem:[%s5 + $0x38] sm:$0xff]
    %v1509 = vld [vmem:[%s5 + $0x40] sm:$0xff]
    %v1510 = vld [vmem:[%s5 + $0x48] sm:$0xff]
    %v1511 = vld [vmem:[%s5 + $0x50] sm:$0xff]
    %v1512 = vld [vmem:[%s5 + $0x58] sm:$0xff]
    %v1513 = vld [vmem:[%s5 + $0x60] sm:$0xff]
    %v1514 = vld [vmem:[%s5 + $0x68] sm:$0xff]
    %v1515 = vld [vmem:[%s5 + $0x70] sm:$0xff]
    %v1516 = vld [vmem:[%s5 + $0x78] sm:$0xff]
    %v1517 = vld [vmem:[%s6] sm:$0x1]
    %v1519 = vlaneseq
    %v1520 = vshrl.u32 %v1519, 7
    %v1521 = vsub.s32 0, %v1520
    %v1522 = vrot.slane %v1517, %v1521
    %v1540 = vrot.slane %v1486, 7
    %vm1541 = vcmask 1041409
    %v1542 = vsel %vm1541, %v1540, %v1485
    %v1543 = vrot.slane %v1487, 6
    %vm1544 = vcmask 1042434
    %v1545 = vsel %vm1544, %v1543, %v1542
    %v1546 = vrot.slane %v1488, 5
    %vm1547 = vcmask 1043459
    %v1548 = vsel %vm1547, %v1546, %v1545
    %v1549 = vrot.slane %v1489, 4
    %vm1550 = vcmask 1044484
    %v1551 = vsel %vm1550, %v1549, %v1548
    %v1552 = vrot.slane %v1490, 3
    %vm1553 = vcmask 1045509
    %v1554 = vsel %vm1553, %v1552, %v1551
    %v1555 = vrot.slane %v1491, 2
    %vm1556 = vcmask 1046534
    %v1557 = vsel %vm1556, %v1555, %v1554
    %v1558 = vrot.slane %v1492, 1
    %vm1559 = vcmask 1047559
    %v1560 = vsel %vm1559, %v1558, %v1557
    %v1561 = vrot.slane %v1494, 7
    %v1562 = vsel %vm1541, %v1561, %v1493
    %v1563 = vrot.slane %v1495, 6
    %v1564 = vsel %vm1544, %v1563, %v1562
    %v1565 = vrot.slane %v1496, 5
    %v1566 = vsel %vm1547, %v1565, %v1564
    %v1567 = vrot.slane %v1497, 4
    %v1568 = vsel %vm1550, %v1567, %v1566
    %v1569 = vrot.slane %v1498, 3
    %v1570 = vsel %vm1553, %v1569, %v1568
    %v1571 = vrot.slane %v1499, 2
    %v1572 = vsel %vm1556, %v1571, %v1570
    %v1573 = vrot.slane %v1500, 1
    %v1574 = vsel %vm1559, %v1573, %v1572
    %1577 = vmatprep.subr.mxu0 0.0
    %1578 = vmatpush1.msra.mxu0 %v1501
    %1579 = vmatprep.subr.mxu0 0.0
    %1580 = vmatpush1.msra.mxu0 %v1502
    %1581 = vmatprep.subr.mxu0 0.0
    %1582 = vmatpush1.msra.mxu0 %v1503
    %1583 = vmatprep.subr.mxu0 0.0
    %1584 = vmatpush1.msra.mxu0 %v1504
    %1585 = vmatprep.subr.mxu0 0.0
    %1586 = vmatpush1.msra.mxu0 %v1505
    %1587 = vmatprep.subr.mxu0 0.0
    %1588 = vmatpush1.msra.mxu0 %v1506
    %1589 = vmatprep.subr.mxu0 0.0
    %1590 = vmatpush1.msra.mxu0 %v1507
    %1591 = vmatprep.subr.mxu0 0.0
    %1592 = vmatpush1.msra.mxu0 %v1508
    %1593 = vmatprep.subr.mxu0 0.0
    %1594 = vmatpush1.msra.mxu0 %v1509
    %1595 = vmatprep.subr.mxu0 0.0
    %1596 = vmatpush1.msra.mxu0 %v1510
    %1597 = vmatprep.subr.mxu0 0.0
    %1598 = vmatpush1.msra.mxu0 %v1511
    %1599 = vmatprep.subr.mxu0 0.0
    %1600 = vmatpush1.msra.mxu0 %v1512
    %1601 = vmatprep.subr.mxu0 0.0
    %1602 = vmatpush1.msra.mxu0 %v1513
    %1603 = vmatprep.subr.mxu0 0.0
    %1604 = vmatpush1.msra.mxu0 %v1514
    %1605 = vmatprep.subr.mxu0 0.0
    %1606 = vmatpush1.msra.mxu0 %v1515
    %1607 = vmatprep.subr.mxu0 0.0
    %1608 = vmatpush1.msra.mxu0 %v1516
    %1609 = vmatprep.subr.mxu0 0.0
    %1610 = vmatpush1.msra.mxu0 0.0
    %1611 = vmatprep.subr.mxu0 0.0
    %1612 = vmatpush1.msra.mxu0 0.0
    %1613 = vmatprep.subr.mxu0 0.0
    %1614 = vmatpush1.msra.mxu0 0.0
    %1615 = vmatprep.subr.mxu0 0.0
    %1616 = vmatpush1.msra.mxu0 0.0
    %1617 = vmatprep.subr.mxu0 0.0
    %1618 = vmatpush1.msra.mxu0 0.0
    %1619 = vmatprep.subr.mxu0 0.0
    %1620 = vmatpush1.msra.mxu0 0.0
    %1621 = vmatprep.subr.mxu0 0.0
    %1622 = vmatpush1.msra.mxu0 0.0
    %1623 = vmatprep.subr.mxu0 0.0
    %1624 = vmatpush1.msra.mxu0 0.0
    %1625 = vmatprep.subr.mxu0 0.0
    %1626 = vmatpush1.msra.mxu0 0.0
    %1627 = vmatprep.subr.mxu0 0.0
    %1628 = vmatpush1.msra.mxu0 0.0
    %1629 = vmatprep.subr.mxu0 0.0
    %1630 = vmatpush1.msra.mxu0 0.0
    %1631 = vmatprep.subr.mxu0 0.0
    %1632 = vmatpush1.msra.mxu0 0.0
    %1633 = vmatprep.subr.mxu0 0.0
    %1634 = vmatpush1.msra.mxu0 0.0
    %1635 = vmatprep.subr.mxu0 0.0
    %1636 = vmatpush1.msra.mxu0 0.0
    %1637 = vmatprep.subr.mxu0 0.0
    %1638 = vmatpush1.msra.mxu0 0.0
    %1639 = vmatprep.subr.mxu0 0.0
    %1640 = vmatpush1.msra.mxu0 0.0
    %1641 = vmatprep.mubr.f32.mxu0 0.0
    %1642 = vmatmul.mubr.f32.gmra.mrb[0].mxu0 %v1560
    %v1643 = vpop.f32.mrb[0].mxu0
    %v1644 = vadd.f32 %v1522, %v1643
    %v1645 = vpop.f32.mrb[0].mxu0
    %1646 = vmatprep.mubr.f32.mxu0 0.0
    %1647 = vmatmul.mubr.f32.gmra.mrb[0].mxu0 %v1574
    %v1648 = vpop.f32.mrb[0].mxu0
    %v1649 = vadd.f32 %v1522, %v1648
    %v1650 = vpop.f32.mrb[0].mxu0
    %1651 = vdwg.mxu0
    %1652 = vst [vmem:[#allocation2] sm:$0xff] %v1644
    %1653 = vst [vmem:[#allocation2 + $0x8] sm:$0xff] %v1649
    // Predicated region
    $region30: #{tpu_custom_call.1} parent=1 // pred_check
      _
    $region31: #{tpu_custom_call.1} parent=1 // pred_check_branch
      %1655 = sbr.rel (0) target = $region33
    $region32: #{tpu_custom_call.1} parent=1 // pred_region
      %s1657 = ssub.s32 256, 256
      %1658 = vsyncadd [#allocation3], %s1657
      %s1659 = sshll.u32 [#allocation2], 4
      %s1660 = int_to_ptr.vmem [resolvable:$true] %s1659
      %1665 = dma.vmem_to_hbm [thread:$0]  %s1660, 256, %s7, [#allocation3], 128, 128, 8
    $region33: #{tpu_custom_call.1} parent=1 // pred_fallthru
      _
    // Predicated region
    $region34: #{tpu_custom_call.1} parent=1 // pred_check
      _
    $region35: #{tpu_custom_call.1} parent=1 // pred_check_branch
      %1667 = sbr.rel (0) target = $region37
    $region36: #{tpu_custom_call.1} parent=1 // pred_region
      %1668 = dma.done [#allocation3], 256
    $region37: #{tpu_custom_call.1} parent=1 // pred_fallthru
      _
    %1669 = vsyncpa [#allocation3], 1

</llo_original>
